<compile_context>
chip_gen: v7x
topology: tpu7x:2x2x1
jax: 0.10.0
libtpu: 0.0.40
codegen_flags: <defaults>
</compile_context>

<pallas_src>
import jax
import jax.numpy as jnp
import numpy as np
from jax.experimental import pallas as pl
from jax.experimental.pallas import tpu as pltpu


def _make_fused_kernel(layer_dims, K):
    """layer_dims: list of (Hin, Win, Cin, Cout) per layer; each layer is
    conv(KxK, pad=(K-1)//2) + folded-BN + ReLU + 2x2 max-pool."""
    n = len(layer_dims)
    pad = (K - 1) // 2

    def kernel(*refs):
        x_ref = refs[0]
        lay_refs = refs[1:1 + 3 * n]          # (w, scale, bias) per layer
        o_ref = refs[1 + 3 * n]
        scratch = refs[2 + 3 * n:]            # (pad_ref, hpool_ref) per layer

        act = x_ref[...]                      # (H, W, C0) f32, batch squeezed
        for li, (Hin, Win, Cin, Cout) in enumerate(layer_dims):
            w_ref, s_ref, b_ref = lay_refs[3 * li: 3 * li + 3]
            pad_ref, hp_ref = scratch[2 * li: 2 * li + 2]
            Hp, Wp = Hin + 2 * pad, Win + 2 * pad
            Ho, Wo = Hin // 2, Win // 2

            # --- in-kernel zero-padding into a VMEM scratch -----------------
            pad_ref[...] = jnp.zeros((Hp, Wp, Cin), jnp.float32)
            pad_ref[pad:pad + Hin, pad:pad + Win, :] = act

            # --- conv as ONE im2col matmul on the MXU -----------------------
            # patch element order (kh, kw, ci) matches the HWIO weight reshape.
            patches = [pad_ref[kh:kh + Hin, kw:kw + Win, :]
                       for kh in range(K) for kw in range(K)]
            p = jnp.concatenate(patches, axis=-1)           # (Hin, Win, K*K*Cin)
            p = p.reshape(Hin * Win, K * K * Cin)           # Win % 8 == 0 -> cheap
            z = jnp.dot(p.astype(jnp.bfloat16), w_ref[...],
                        preferred_element_type=jnp.float32)  # (Hin*Win, Cout) f32

            # --- folded BatchNorm (inference) + ReLU, once per layer --------
            y = jnp.maximum(z * s_ref[...] + b_ref[...], 0.0)

            # --- 2x2 max pool ------------------------------------------------
            # H direction: rows [2h*Win, (2h+1)*Win) vs [(2h+1)*Win, (2h+2)*Win)
            # are the two aligned sublane halves of a leading-split reshape.
            t = y.reshape(Ho, 2 * Win, Cout)
            yh = jnp.maximum(t[:, :Win, :], t[:, Win:, :])   # (Ho, Win, Cout)
            # W direction: stride-2 reads from a VMEM scratch (no MXU).
            hp_ref[...] = yh
            act = jnp.maximum(hp_ref[:, pl.ds(0, Wo, stride=2), :],
                              hp_ref[:, pl.ds(1, Wo, stride=2), :])  # (Ho, Wo, Cout)

        o_ref[...] = act.astype(o_ref.dtype)

    return kernel


def cnn2d_block(x_nchw, params, k=3):
    """Fused forward pass of CNN2DBlock (eval-mode BN folded into params)."""
    x = jnp.transpose(x_nchw, (0, 2, 3, 1))          # NCHW -> NHWC
    B, H, W, C0 = x.shape
    pad = (k - 1) // 2

    layer_dims = []
    flat_inputs = []
    in_specs = [pl.BlockSpec((None, H, W, C0), lambda b: (b, 0, 0, 0))]
    scratch_shapes = []

    h, w_dim, c = H, W, C0
    for (wgt, s, bias) in params:
        assert h % 2 == 0 and w_dim % 2 == 0, "even spatial dims required"
        cout = wgt.shape[-1]
        layer_dims.append((h, w_dim, c, cout))
        # HWIO (k,k,cin,cout) -> (k*k*cin, cout), bf16 for the native MXU path.
        flat_inputs += [wgt.reshape(k * k * c, cout).astype(jnp.bfloat16),
                        s.reshape(1, cout).astype(jnp.float32),
                        bias.reshape(1, cout).astype(jnp.float32)]
        in_specs += [pl.BlockSpec((k * k * c, cout), lambda b: (0, 0)),
                     pl.BlockSpec((1, cout), lambda b: (0, 0)),
                     pl.BlockSpec((1, cout), lambda b: (0, 0))]
        scratch_shapes += [
            pltpu.VMEM((h + 2 * pad, w_dim + 2 * pad, c), jnp.float32),  # padded act
            pltpu.VMEM((h // 2, w_dim, cout), jnp.float32),              # H-pooled act
        ]
        h, w_dim, c = h // 2, w_dim // 2, cout

    out = pl.pallas_call(
        _make_fused_kernel(layer_dims, k),
        out_shape=jax.ShapeDtypeStruct((B, h, w_dim, c), x.dtype),
        grid=(B,),                                   # 2 parallel steps -> both v7x TCs
        in_specs=in_specs,
        out_specs=pl.BlockSpec((None, h, w_dim, c), lambda b: (b, 0, 0, 0)),
        scratch_shapes=scratch_shapes,
        compiler_params=pltpu.CompilerParams(dimension_semantics=("parallel",)),
    )(x, *flat_inputs)
    return jnp.transpose(out, (0, 3, 1, 2))          # NHWC -> NCHW


def init_params(key, conv_num, cnn_num_kernels, k=3, eps=1e-5):
    """Deterministic synthetic parameters; BN folded into (scale, bias)."""
    params = []
    for i in range(conv_num):
        cin, cout = cnn_num_kernels[i], cnn_num_kernels[i + 1]
        key, kw_, kb_, kg_, kbe_, km_, kv_ = jax.random.split(key, 7)
        w = 0.3 * jax.random.normal(kw_, (k, k, cin, cout), jnp.float32)   # HWIO
        conv_b = 0.1 * jax.random.normal(kb_, (cout,), jnp.float32)
        gamma = 1.0 + 0.1 * jax.random.normal(kg_, (cout,), jnp.float32)
        beta = 0.1 * jax.random.normal(kbe_, (cout,), jnp.float32)
        running_mean = 0.1 * jax.random.normal(km_, (cout,), jnp.float32)
        running_var = jax.random.uniform(kv_, (cout,), jnp.float32, 0.5, 1.5)
        s = gamma / jnp.sqrt(running_var + eps)
        b = (conv_b - running_mean) * s + beta
        params.append((w, s, b))
    return params


def _reference(x_nchw, params):
    """Pure-JAX reference. Conv inputs are cast to bf16 (f32 accumulation),
    matching the kernel's MXU input rounding, so the comparison stays tight."""
    x = jnp.transpose(x_nchw, (0, 2, 3, 1))
    for (w, s, b) in params:
        conv = jax.lax.conv_general_dilated(
            x.astype(jnp.bfloat16), w.astype(jnp.bfloat16),
            window_strides=(1, 1), padding="SAME",
            dimension_numbers=("NHWC", "HWIO", "NHWC"),
            preferred_element_type=jnp.float32)
        y = jnp.maximum(conv * s.reshape(1, 1, 1, -1) + b.reshape(1, 1, 1, -1), 0.0)
        x = jax.lax.reduce_window(y, -jnp.inf, jax.lax.max,
                                  (1, 2, 2, 1), (1, 2, 2, 1), "VALID")
    return jnp.transpose(x, (0, 3, 1, 2))


if __name__ == "__main__":
    key = jax.random.PRNGKey(0)
    kx, kp = jax.random.split(key)

    # CNN2DBlock(conv_num=2, cnn_num_kernels=[4, 8, 16], kernel=3, maxpool=2)
    conv_num = 2
    cnn_num_kernels = [4, 8, 16]

    x = jax.random.normal(kx, (2, 4, 16, 16), jnp.float32)   # NCHW, like PyTorch
    params = init_params(kp, conv_num, cnn_num_kernels)

    fwd = jax.jit(cnn2d_block)
    out = jax.block_until_ready(fwd(x, params))
    assert out.shape == (2, 16, 4, 4), out.shape

    ref = _reference(x, params)
    np.testing.assert_allclose(np.asarray(out), np.asarray(ref), atol=1e-2, rtol=1e-2)

    print("KERNEL_OK")
</pallas_src>

<mosaic_0001>
module attributes {stable_mosaic.version = 11 : i64} {
  func.func @kernel(%arg0: i32, %arg1: memref<1x16x16x4xf32, #tpu.memory_space<vmem>>, %arg2: memref<36x8xbf16, #tpu.memory_space<vmem>>, %arg3: memref<1x8xf32, #tpu.memory_space<vmem>>, %arg4: memref<1x8xf32, #tpu.memory_space<vmem>>, %arg5: memref<72x16xbf16, #tpu.memory_space<vmem>>, %arg6: memref<1x16xf32, #tpu.memory_space<vmem>>, %arg7: memref<1x16xf32, #tpu.memory_space<vmem>>, %arg8: memref<1x4x4x16xf32, #tpu.memory_space<vmem>>, %arg9: memref<18x18x4xf32, #tpu.memory_space<vmem>>, %arg10: memref<8x16x8xf32, #tpu.memory_space<vmem>>, %arg11: memref<10x10x8xf32, #tpu.memory_space<vmem>>, %arg12: memref<4x8x16xf32, #tpu.memory_space<vmem>>) attributes {dimension_semantics = [#tpu.dimension_semantics<parallel>], iteration_bounds = array<i64: 2>, scalar_prefetch = 0 : i64, scratch_operands = 4 : i64, tpu.core_type = #tpu.core_type<tc>, window_params = [{transform_indices = @transform_0, window_bounds = array<i64: 1, 16, 16, 4>}, {pipeline_mode = #tpu.pipeline_mode<synchronous>, transform_indices = @transform_1, window_bounds = array<i64: 36, 8>}, {pipeline_mode = #tpu.pipeline_mode<synchronous>, transform_indices = @transform_2, window_bounds = array<i64: 1, 8>}, {pipeline_mode = #tpu.pipeline_mode<synchronous>, transform_indices = @transform_3, window_bounds = array<i64: 1, 8>}, {pipeline_mode = #tpu.pipeline_mode<synchronous>, transform_indices = @transform_4, window_bounds = array<i64: 72, 16>}, {pipeline_mode = #tpu.pipeline_mode<synchronous>, transform_indices = @transform_5, window_bounds = array<i64: 1, 16>}, {pipeline_mode = #tpu.pipeline_mode<synchronous>, transform_indices = @transform_6, window_bounds = array<i64: 1, 16>}, {transform_indices = @transform_7, window_bounds = array<i64: 1, 4, 4, 16>}]} {
    %c0 = arith.constant 0 : index
    %c0_0 = arith.constant 0 : index
    %c0_1 = arith.constant 0 : index
    %c0_2 = arith.constant 0 : index
    %0 = vector.load %arg1[%c0, %c0_0, %c0_1, %c0_2] : memref<1x16x16x4xf32, #tpu.memory_space<vmem>>, vector<1x16x16x4xf32>
    %1 = vector.shape_cast %0 : vector<1x16x16x4xf32> to vector<16x16x4xf32>
    %cst = arith.constant 0.000000e+00 : f32
    %2 = vector.broadcast %cst : f32 to vector<18x18x4xf32>
    %c0_3 = arith.constant 0 : index
    %c0_4 = arith.constant 0 : index
    %c0_5 = arith.constant 0 : index
    %3 = vector.load %arg9[%c0_3, %c0_4, %c0_5] : memref<18x18x4xf32, #tpu.memory_space<vmem>>, vector<18x18x4xf32>
    tpu.vector_store %arg9[%c0_3, %c0_4, %c0_5], %2 {strides = array<i32>} : memref<18x18x4xf32, #tpu.memory_space<vmem>>, vector<18x18x4xf32>,
    %c1 = arith.constant 1 : index
    %c1_6 = arith.constant 1 : index
    %c0_7 = arith.constant 0 : index
    %4 = vector.load %arg9[%c1, %c1_6, %c0_7] : memref<18x18x4xf32, #tpu.memory_space<vmem>>, vector<16x16x4xf32>
    tpu.vector_store %arg9[%c1, %c1_6, %c0_7], %1 {strides = array<i32>} : memref<18x18x4xf32, #tpu.memory_space<vmem>>, vector<16x16x4xf32>,
    %c0_8 = arith.constant 0 : index
    %c0_9 = arith.constant 0 : index
    %c0_10 = arith.constant 0 : index
    %5 = vector.load %arg9[%c0_8, %c0_9, %c0_10] : memref<18x18x4xf32, #tpu.memory_space<vmem>>, vector<16x16x4xf32>
    %c0_11 = arith.constant 0 : index
    %c1_12 = arith.constant 1 : index
    %c0_13 = arith.constant 0 : index
    %6 = vector.load %arg9[%c0_11, %c1_12, %c0_13] : memref<18x18x4xf32, #tpu.memory_space<vmem>>, vector<16x16x4xf32>
    %c0_14 = arith.constant 0 : index
    %c2 = arith.constant 2 : index
    %c0_15 = arith.constant 0 : index
    %7 = vector.load %arg9[%c0_14, %c2, %c0_15] : memref<18x18x4xf32, #tpu.memory_space<vmem>>, vector<16x16x4xf32>
    %c1_16 = arith.constant 1 : index
    %c0_17 = arith.constant 0 : index
    %c0_18 = arith.constant 0 : index
    %8 = vector.load %arg9[%c1_16, %c0_17, %c0_18] : memref<18x18x4xf32, #tpu.memory_space<vmem>>, vector<16x16x4xf32>
    %c1_19 = arith.constant 1 : index
    %c1_20 = arith.constant 1 : index
    %c0_21 = arith.constant 0 : index
    %9 = vector.load %arg9[%c1_19, %c1_20, %c0_21] : memref<18x18x4xf32, #tpu.memory_space<vmem>>, vector<16x16x4xf32>
    %c1_22 = arith.constant 1 : index
    %c2_23 = arith.constant 2 : index
    %c0_24 = arith.constant 0 : index
    %10 = vector.load %arg9[%c1_22, %c2_23, %c0_24] : memref<18x18x4xf32, #tpu.memory_space<vmem>>, vector<16x16x4xf32>
    %c2_25 = arith.constant 2 : index
    %c0_26 = arith.constant 0 : index
    %c0_27 = arith.constant 0 : index
    %11 = vector.load %arg9[%c2_25, %c0_26, %c0_27] : memref<18x18x4xf32, #tpu.memory_space<vmem>>, vector<16x16x4xf32>
    %c2_28 = arith.constant 2 : index
    %c1_29 = arith.constant 1 : index
    %c0_30 = arith.constant 0 : index
    %12 = vector.load %arg9[%c2_28, %c1_29, %c0_30] : memref<18x18x4xf32, #tpu.memory_space<vmem>>, vector<16x16x4xf32>
    %c2_31 = arith.constant 2 : index
    %c2_32 = arith.constant 2 : index
    %c0_33 = arith.constant 0 : index
    %13 = vector.load %arg9[%c2_31, %c2_32, %c0_33] : memref<18x18x4xf32, #tpu.memory_space<vmem>>, vector<16x16x4xf32>
    %14 = tpu.concatenate %5, %6, %7, %8, %9, %10, %11, %12, %13 in 2 : vector<16x16x4xf32>, vector<16x16x4xf32>, vector<16x16x4xf32>, vector<16x16x4xf32>, vector<16x16x4xf32>, vector<16x16x4xf32>, vector<16x16x4xf32>, vector<16x16x4xf32>, vector<16x16x4xf32> -> vector<16x16x36xf32>
    %15 = vector.shape_cast %14 : vector<16x16x36xf32> to vector<256x36xf32>
    %16 = arith.truncf %15 : vector<256x36xf32> to vector<256x36xbf16>
    %c0_34 = arith.constant 0 : index
    %c0_35 = arith.constant 0 : index
    %17 = vector.load %arg2[%c0_34, %c0_35] : memref<36x8xbf16, #tpu.memory_space<vmem>>, vector<36x8xbf16>
    %cst_36 = arith.constant dense<0.000000e+00> : vector<256x8xf32>
    %18 = tpu.matmul %16, %17, %cst_36 {dimension_numbers = #tpu.dot_dimension_numbers<[1], [0], [0], [1], [0, 0, 1, 1], [], []>} : vector<256x36xbf16>, vector<36x8xbf16>, vector<256x8xf32> -> vector<256x8xf32>
    %c0_37 = arith.constant 0 : index
    %c0_38 = arith.constant 0 : index
    %19 = vector.load %arg3[%c0_37, %c0_38] : memref<1x8xf32, #tpu.memory_space<vmem>>, vector<1x8xf32>
    %20 = vector.broadcast %19 : vector<1x8xf32> to vector<256x8xf32>
    %21 = arith.mulf %18, %20 : vector<256x8xf32>
    %c0_39 = arith.constant 0 : index
    %c0_40 = arith.constant 0 : index
    %22 = vector.load %arg4[%c0_39, %c0_40] : memref<1x8xf32, #tpu.memory_space<vmem>>, vector<1x8xf32>
    %23 = vector.broadcast %22 : vector<1x8xf32> to vector<256x8xf32>
    %24 = arith.addf %21, %23 : vector<256x8xf32>
    %cst_41 = arith.constant 0.000000e+00 : f32
    %25 = vector.broadcast %cst_41 : f32 to vector<256x8xf32>
    %26 = arith.maximumf %24, %25 : vector<256x8xf32>
    %27 = vector.shape_cast %26 : vector<256x8xf32> to vector<8x32x8xf32>
    %28 = vector.extract_strided_slice %27 {offsets = [0, 0, 0], sizes = [8, 16, 8], strides = [1, 1, 1]} : vector<8x32x8xf32> to vector<8x16x8xf32>
    %29 = vector.extract_strided_slice %27 {offsets = [0, 16, 0], sizes = [8, 16, 8], strides = [1, 1, 1]} : vector<8x32x8xf32> to vector<8x16x8xf32>
    %30 = arith.maximumf %28, %29 : vector<8x16x8xf32>
    %c0_42 = arith.constant 0 : index
    %c0_43 = arith.constant 0 : index
    %c0_44 = arith.constant 0 : index
    %31 = vector.load %arg10[%c0_42, %c0_43, %c0_44] : memref<8x16x8xf32, #tpu.memory_space<vmem>>, vector<8x16x8xf32>
    tpu.vector_store %arg10[%c0_42, %c0_43, %c0_44], %30 {strides = array<i32>} : memref<8x16x8xf32, #tpu.memory_space<vmem>>, vector<8x16x8xf32>,
    %c0_45 = arith.constant 0 : index
    %c0_46 = arith.constant 0 : index
    %c0_47 = arith.constant 0 : index
    %32 = tpu.strided_load %arg10[%c0_45, %c0_46, %c0_47] {strides = array<i32: 1, 2, 1>} : memref<8x16x8xf32, #tpu.memory_space<vmem>>, vector<8x8x8xf32>
    %c0_48 = arith.constant 0 : index
    %c1_49 = arith.constant 1 : index
    %c0_50 = arith.constant 0 : index
    %33 = tpu.strided_load %arg10[%c0_48, %c1_49, %c0_50] {strides = array<i32: 1, 2, 1>} : memref<8x16x8xf32, #tpu.memory_space<vmem>>, vector<8x8x8xf32>
    %34 = arith.maximumf %32, %33 : vector<8x8x8xf32>
    %cst_51 = arith.constant 0.000000e+00 : f32
    %35 = vector.broadcast %cst_51 : f32 to vector<10x10x8xf32>
    %c0_52 = arith.constant 0 : index
    %c0_53 = arith.constant 0 : index
    %c0_54 = arith.constant 0 : index
    %36 = vector.load %arg11[%c0_52, %c0_53, %c0_54] : memref<10x10x8xf32, #tpu.memory_space<vmem>>, vector<10x10x8xf32>
    tpu.vector_store %arg11[%c0_52, %c0_53, %c0_54], %35 {strides = array<i32>} : memref<10x10x8xf32, #tpu.memory_space<vmem>>, vector<10x10x8xf32>,
    %c1_55 = arith.constant 1 : index
    %c1_56 = arith.constant 1 : index
    %c0_57 = arith.constant 0 : index
    %37 = vector.load %arg11[%c1_55, %c1_56, %c0_57] : memref<10x10x8xf32, #tpu.memory_space<vmem>>, vector<8x8x8xf32>
    tpu.vector_store %arg11[%c1_55, %c1_56, %c0_57], %34 {strides = array<i32>} : memref<10x10x8xf32, #tpu.memory_space<vmem>>, vector<8x8x8xf32>,
    %c0_58 = arith.constant 0 : index
    %c0_59 = arith.constant 0 : index
    %c0_60 = arith.constant 0 : index
    %38 = vector.load %arg11[%c0_58, %c0_59, %c0_60] : memref<10x10x8xf32, #tpu.memory_space<vmem>>, vector<8x8x8xf32>
    %c0_61 = arith.constant 0 : index
    %c1_62 = arith.constant 1 : index
    %c0_63 = arith.constant 0 : index
    %39 = vector.load %arg11[%c0_61, %c1_62, %c0_63] : memref<10x10x8xf32, #tpu.memory_space<vmem>>, vector<8x8x8xf32>
    %c0_64 = arith.constant 0 : index
    %c2_65 = arith.constant 2 : index
    %c0_66 = arith.constant 0 : index
    %40 = vector.load %arg11[%c0_64, %c2_65, %c0_66] : memref<10x10x8xf32, #tpu.memory_space<vmem>>, vector<8x8x8xf32>
    %c1_67 = arith.constant 1 : index
    %c0_68 = arith.constant 0 : index
    %c0_69 = arith.constant 0 : index
    %41 = vector.load %arg11[%c1_67, %c0_68, %c0_69] : memref<10x10x8xf32, #tpu.memory_space<vmem>>, vector<8x8x8xf32>
    %c1_70 = arith.constant 1 : index
    %c1_71 = arith.constant 1 : index
    %c0_72 = arith.constant 0 : index
    %42 = vector.load %arg11[%c1_70, %c1_71, %c0_72] : memref<10x10x8xf32, #tpu.memory_space<vmem>>, vector<8x8x8xf32>
    %c1_73 = arith.constant 1 : index
    %c2_74 = arith.constant 2 : index
    %c0_75 = arith.constant 0 : index
    %43 = vector.load %arg11[%c1_73, %c2_74, %c0_75] : memref<10x10x8xf32, #tpu.memory_space<vmem>>, vector<8x8x8xf32>
    %c2_76 = arith.constant 2 : index
    %c0_77 = arith.constant 0 : index
    %c0_78 = arith.constant 0 : index
    %44 = vector.load %arg11[%c2_76, %c0_77, %c0_78] : memref<10x10x8xf32, #tpu.memory_space<vmem>>, vector<8x8x8xf32>
    %c2_79 = arith.constant 2 : index
    %c1_80 = arith.constant 1 : index
    %c0_81 = arith.constant 0 : index
    %45 = vector.load %arg11[%c2_79, %c1_80, %c0_81] : memref<10x10x8xf32, #tpu.memory_space<vmem>>, vector<8x8x8xf32>
    %c2_82 = arith.constant 2 : index
    %c2_83 = arith.constant 2 : index
    %c0_84 = arith.constant 0 : index
    %46 = vector.load %arg11[%c2_82, %c2_83, %c0_84] : memref<10x10x8xf32, #tpu.memory_space<vmem>>, vector<8x8x8xf32>
    %47 = tpu.concatenate %38, %39, %40, %41, %42, %43, %44, %45, %46 in 2 : vector<8x8x8xf32>, vector<8x8x8xf32>, vector<8x8x8xf32>, vector<8x8x8xf32>, vector<8x8x8xf32>, vector<8x8x8xf32>, vector<8x8x8xf32>, vector<8x8x8xf32>, vector<8x8x8xf32> -> vector<8x8x72xf32>
    %48 = vector.shape_cast %47 : vector<8x8x72xf32> to vector<64x72xf32>
    %49 = arith.truncf %48 : vector<64x72xf32> to vector<64x72xbf16>
    %c0_85 = arith.constant 0 : index
    %c0_86 = arith.constant 0 : index
    %50 = vector.load %arg5[%c0_85, %c0_86] : memref<72x16xbf16, #tpu.memory_space<vmem>>, vector<72x16xbf16>
    %cst_87 = arith.constant dense<0.000000e+00> : vector<64x16xf32>
    %51 = tpu.matmul %49, %50, %cst_87 {dimension_numbers = #tpu.dot_dimension_numbers<[1], [0], [0], [1], [0, 0, 1, 1], [], []>} : vector<64x72xbf16>, vector<72x16xbf16>, vector<64x16xf32> -> vector<64x16xf32>
    %c0_88 = arith.constant 0 : index
    %c0_89 = arith.constant 0 : index
    %52 = vector.load %arg6[%c0_88, %c0_89] : memref<1x16xf32, #tpu.memory_space<vmem>>, vector<1x16xf32>
    %53 = vector.broadcast %52 : vector<1x16xf32> to vector<64x16xf32>
    %54 = arith.mulf %51, %53 : vector<64x16xf32>
    %c0_90 = arith.constant 0 : index
    %c0_91 = arith.constant 0 : index
    %55 = vector.load %arg7[%c0_90, %c0_91] : memref<1x16xf32, #tpu.memory_space<vmem>>, vector<1x16xf32>
    %56 = vector.broadcast %55 : vector<1x16xf32> to vector<64x16xf32>
    %57 = arith.addf %54, %56 : vector<64x16xf32>
    %cst_92 = arith.constant 0.000000e+00 : f32
    %58 = vector.broadcast %cst_92 : f32 to vector<64x16xf32>
    %59 = arith.maximumf %57, %58 : vector<64x16xf32>
    %60 = vector.shape_cast %59 : vector<64x16xf32> to vector<4x16x16xf32>
    %61 = vector.extract_strided_slice %60 {offsets = [0, 0, 0], sizes = [4, 8, 16], strides = [1, 1, 1]} : vector<4x16x16xf32> to vector<4x8x16xf32>
    %62 = vector.extract_strided_slice %60 {offsets = [0, 8, 0], sizes = [4, 8, 16], strides = [1, 1, 1]} : vector<4x16x16xf32> to vector<4x8x16xf32>
    %63 = arith.maximumf %61, %62 : vector<4x8x16xf32>
    %c0_93 = arith.constant 0 : index
    %c0_94 = arith.constant 0 : index
    %c0_95 = arith.constant 0 : index
    %64 = vector.load %arg12[%c0_93, %c0_94, %c0_95] : memref<4x8x16xf32, #tpu.memory_space<vmem>>, vector<4x8x16xf32>
    tpu.vector_store %arg12[%c0_93, %c0_94, %c0_95], %63 {strides = array<i32>} : memref<4x8x16xf32, #tpu.memory_space<vmem>>, vector<4x8x16xf32>,
    %c0_96 = arith.constant 0 : index
    %c0_97 = arith.constant 0 : index
    %c0_98 = arith.constant 0 : index
    %65 = tpu.strided_load %arg12[%c0_96, %c0_97, %c0_98] {strides = array<i32: 1, 2, 1>} : memref<4x8x16xf32, #tpu.memory_space<vmem>>, vector<4x4x16xf32>
    %c0_99 = arith.constant 0 : index
    %c1_100 = arith.constant 1 : index
    %c0_101 = arith.constant 0 : index
    %66 = tpu.strided_load %arg12[%c0_99, %c1_100, %c0_101] {strides = array<i32: 1, 2, 1>} : memref<4x8x16xf32, #tpu.memory_space<vmem>>, vector<4x4x16xf32>
    %67 = arith.maximumf %65, %66 : vector<4x4x16xf32>
    %c0_102 = arith.constant 0 : index
    %c0_103 = arith.constant 0 : index
    %c0_104 = arith.constant 0 : index
    %c0_105 = arith.constant 0 : index
    %68 = vector.load %arg8[%c0_102, %c0_103, %c0_104, %c0_105] : memref<1x4x4x16xf32, #tpu.memory_space<vmem>>, vector<1x4x4x16xf32>
    %69 = vector.shape_cast %68 : vector<1x4x4x16xf32> to vector<4x4x16xf32>
    %70 = vector.shape_cast %67 : vector<4x4x16xf32> to vector<1x4x4x16xf32>
    tpu.vector_store %arg8[%c0_102, %c0_103, %c0_104, %c0_105], %70 {strides = array<i32>} : memref<1x4x4x16xf32, #tpu.memory_space<vmem>>, vector<1x4x4x16xf32>,
    return
  }
  func.func @transform_0(%arg0: i32) -> (i32, i32, i32, i32) {
    %c0_i32 = arith.constant 0 : i32
    %c0_i32_0 = arith.constant 0 : i32
    %c0_i32_1 = arith.constant 0 : i32
    %c0_i32_2 = arith.constant 0 : i32
    return %arg0, %c0_i32, %c0_i32_0, %c0_i32_1 : i32, i32, i32, i32
  }
  func.func @transform_1(%arg0: i32) -> (i32, i32) {
    %c0_i32 = arith.constant 0 : i32
    %c0_i32_0 = arith.constant 0 : i32
    %c0_i32_1 = arith.constant 0 : i32
    return %c0_i32, %c0_i32_0 : i32, i32
  }
  func.func @transform_2(%arg0: i32) -> (i32, i32) {
    %c0_i32 = arith.constant 0 : i32
    %c0_i32_0 = arith.constant 0 : i32
    %c0_i32_1 = arith.constant 0 : i32
    return %c0_i32, %c0_i32_0 : i32, i32
  }
  func.func @transform_3(%arg0: i32) -> (i32, i32) {
    %c0_i32 = arith.constant 0 : i32
    %c0_i32_0 = arith.constant 0 : i32
    %c0_i32_1 = arith.constant 0 : i32
    return %c0_i32, %c0_i32_0 : i32, i32
  }
  func.func @transform_4(%arg0: i32) -> (i32, i32) {
    %c0_i32 = arith.constant 0 : i32
    %c0_i32_0 = arith.constant 0 : i32
    %c0_i32_1 = arith.constant 0 : i32
    return %c0_i32, %c0_i32_0 : i32, i32
  }
  func.func @transform_5(%arg0: i32) -> (i32, i32) {
    %c0_i32 = arith.constant 0 : i32
    %c0_i32_0 = arith.constant 0 : i32
    %c0_i32_1 = arith.constant 0 : i32
    return %c0_i32, %c0_i32_0 : i32, i32
  }
  func.func @transform_6(%arg0: i32) -> (i32, i32) {
    %c0_i32 = arith.constant 0 : i32
    %c0_i32_0 = arith.constant 0 : i32
    %c0_i32_1 = arith.constant 0 : i32
    return %c0_i32, %c0_i32_0 : i32, i32
  }
  func.func @transform_7(%arg0: i32) -> (i32, i32, i32, i32) {
    %c0_i32 = arith.constant 0 : i32
    %c0_i32_0 = arith.constant 0 : i32
    %c0_i32_1 = arith.constant 0 : i32
    %c0_i32_2 = arith.constant 0 : i32
    return %arg0, %c0_i32, %c0_i32_0, %c0_i32_1 : i32, i32, i32, i32
  }
}

</mosaic_0001>

<llo_original>
// kernel: cnn2d_block.1
$region0: #{cnn2d_block.1}
  #allocation0 [shape = 'u32[]', space=smem, size = 0x4, offset = 0x4, fixed_abs, tag = 'smem constant byte address 0x4 - core index']
  #allocation1 [shape = 'u32[144,128]{1,0:T(1,128)}', space=vmem, size = 0x12000, scoped, tag = 'internal scratch']
  #allocation2 [shape = 'f32[18,18,4]{2,1,0:T(8,128)}', space=vmem, size = 0x36000, scoped, tag = 'scratch operand']
  #allocation3 [shape = 'f32[8,16,8]{2,1,0:T(8,128)}', space=vmem, size = 0x10000, scoped, tag = 'scratch operand']
  #allocation4 [shape = 'f32[10,10,8]{2,1,0:T(8,128)}', space=vmem, size = 0x14000, scoped, tag = 'scratch operand']
  #allocation5 [shape = 'f32[4,8,16]{2,1,0:T(8,128)}', space=vmem, size = 0x4000, scoped, tag = 'scratch operand']
  %s0 = inlined_call_operand.vmem [shape: f32[2,16,16,4], index: 0, kind: input, shape index: {}]
  %s1 = inlined_call_operand.vmem [shape: bf16[36,8], index: 1, kind: input, shape index: {}]
  %s2 = inlined_call_operand.vmem [shape: f32[1,8], index: 2, kind: input, shape index: {}]
  %s3 = inlined_call_operand.vmem [shape: f32[1,8], index: 3, kind: input, shape index: {}]
  %s4 = inlined_call_operand.vmem [shape: bf16[72,16], index: 4, kind: input, shape index: {}]
  %s5 = inlined_call_operand.vmem [shape: f32[1,16], index: 5, kind: input, shape index: {}]
  %s6 = inlined_call_operand.vmem [shape: f32[1,16], index: 6, kind: input, shape index: {}]
  %s7 = inlined_call_operand.hbm [shape: f32[2,4,4,16], index: 7, kind: output, shape index: {}]
  %s8 = sld [smem:[#allocation0]]
  $region61: #{cnn2d_block.1} parent=0
    _
  %s10 = ssub.s32 1, %s8
  %s11 = scalar_select 0, %s10, %s8
  $region1: #{cnn2d_block.1} parent=0
    #allocation6 [shape = 'u8[16384]{0}', space=vmem, size = 0x4000, scoped, tag = 'output window, operand 0']
    #allocation7 [shape = 's32[2]{0}', space=sflag, size = 0x8, scoped, tag = 'scoped memory for cnn2d_block.1']
    %12 = vsyncpa [#allocation7], 0
    %s13 = scalar_lea.sflag [#allocation7], 1
    %14 = vsyncpa %s13, 0
    loop: start=0, step=1, limit=4
    $region2: #{cnn2d_block.1} parent=1 // loop_pre_header
      _
    $region3: #{cnn2d_block.1} parent=1 // loop_header
      %s16 = sphi 0, %s20
      %p17 = scmp.ge.s32.totalorder %s16, 4
      %s26 = sphi 0, %s28
      %s29 = sphi 0, %s26
      %s30 = sphi 0, %s29
      %s46 = sphi 0, %s30
      %s50 = sphi 0, %s50
      %s52 = sphi 0, %s50
      %s53 = sphi 0, %s52
      %s67 = sphi 0, %s53
      %s71 = sphi 0, %s71
      %s73 = sphi 0, %s71
      %s74 = sphi 0, %s73
      %s88 = sphi 0, %s74
      %s92 = sphi 0, %s92
      %s94 = sphi 0, %s92
      %s95 = sphi 0, %s94
      %s109 = sphi 0, %s95
      %s113 = sphi 0, %s113
      %s115 = sphi 0, %s113
      %s116 = sphi 0, %s115
      %s130 = sphi 0, %s116
      %s134 = sphi 0, %s134
      %s136 = sphi 0, %s134
      %s137 = sphi 0, %s136
      %s151 = sphi 0, %s137
      %s155 = sphi 0, %s155
      %s157 = sphi 0, %s155
      %s158 = sphi 0, %s157
      %s172 = sphi 0, %s158
      %s178 = sphi 0, %s180
      %s181 = sphi 0, %s178
      %s182 = sphi 0, %s181
      %s198 = sphi 0, %s182
    $region4: #{cnn2d_block.1} parent=1 // loop_header_branch
      %19 = sbr.rel (%p17) target = $region8
    $region5: #{cnn2d_block.1} parent=1 // loop_body
      %s21 = ssub.s32 %s16, 1
      %s22 = ssub.s32 %s16, 2
      %s23 = sadd.s32 %s16, 1
      %s24 = ssub.s32 %s16, %s23
      %p25 = scmp.eq.s32.totalorder %s24, 0
      %s27 = sadd.s32 %s26, 1
      %s28 = scalar_select %p25, %s26, %s27
      %p31 = pneg %p25
      %p32 = scmp.eq.s32.totalorder %s16, 1
      %p33 = por %p31, %p32
      %p34 = scmp.ne.s32.totalorder %s26, %s29
      %p35 = scmp.eq.s32.totalorder %s16, 0
      %p36 = por %p34, %p35
      %p37 = scmp.ne.s32.totalorder %s26, %s29
      %p38 = scmp.eq.s32.totalorder %s21, 1
      %p39 = por %p37, %p38
      %p40 = scmp.ne.s32.totalorder %s29, %s30
      %p41 = scmp.eq.s32.totalorder %s21, 0
      %p42 = por %p40, %p41
      %p43 = scmp.ne.s32.totalorder %s29, %s30
      %p44 = scmp.eq.s32.totalorder %s22, 1
      %p45 = por %p43, %p44
      %p47 = scmp.ne.s32.totalorder %s30, %s46
      %p48 = scmp.eq.s32.totalorder %s22, 0
      %p49 = por %p47, %p48
      %s51 = sadd.s32 %s50, 1
      %p54 = scmp.eq.s32.totalorder %s16, 1
      %p55 = scmp.ne.s32.totalorder %s50, %s52
      %p56 = scmp.eq.s32.totalorder %s16, 0
      %p57 = por %p55, %p56
      %p58 = scmp.ne.s32.totalorder %s50, %s52
      %p59 = scmp.eq.s32.totalorder %s21, 1
      %p60 = por %p58, %p59
      %p61 = scmp.ne.s32.totalorder %s52, %s53
      %p62 = scmp.eq.s32.totalorder %s21, 0
      %p63 = por %p61, %p62
      %p64 = scmp.ne.s32.totalorder %s52, %s53
      %p65 = scmp.eq.s32.totalorder %s22, 1
      %p66 = por %p64, %p65
      %p68 = scmp.ne.s32.totalorder %s53, %s67
      %p69 = scmp.eq.s32.totalorder %s22, 0
      %p70 = por %p68, %p69
      %s72 = sadd.s32 %s71, 1
      %p75 = scmp.eq.s32.totalorder %s16, 1
      %p76 = scmp.ne.s32.totalorder %s71, %s73
      %p77 = scmp.eq.s32.totalorder %s16, 0
      %p78 = por %p76, %p77
      %p79 = scmp.ne.s32.totalorder %s71, %s73
      %p80 = scmp.eq.s32.totalorder %s21, 1
      %p81 = por %p79, %p80
      %p82 = scmp.ne.s32.totalorder %s73, %s74
      %p83 = scmp.eq.s32.totalorder %s21, 0
      %p84 = por %p82, %p83
      %p85 = scmp.ne.s32.totalorder %s73, %s74
      %p86 = scmp.eq.s32.totalorder %s22, 1
      %p87 = por %p85, %p86
      %p89 = scmp.ne.s32.totalorder %s74, %s88
      %p90 = scmp.eq.s32.totalorder %s22, 0
      %p91 = por %p89, %p90
      %s93 = sadd.s32 %s92, 1
      %p96 = scmp.eq.s32.totalorder %s16, 1
      %p97 = scmp.ne.s32.totalorder %s92, %s94
      %p98 = scmp.eq.s32.totalorder %s16, 0
      %p99 = por %p97, %p98
      %p100 = scmp.ne.s32.totalorder %s92, %s94
      %p101 = scmp.eq.s32.totalorder %s21, 1
      %p102 = por %p100, %p101
      %p103 = scmp.ne.s32.totalorder %s94, %s95
      %p104 = scmp.eq.s32.totalorder %s21, 0
      %p105 = por %p103, %p104
      %p106 = scmp.ne.s32.totalorder %s94, %s95
      %p107 = scmp.eq.s32.totalorder %s22, 1
      %p108 = por %p106, %p107
      %p110 = scmp.ne.s32.totalorder %s95, %s109
      %p111 = scmp.eq.s32.totalorder %s22, 0
      %p112 = por %p110, %p111
      %s114 = sadd.s32 %s113, 1
      %p117 = scmp.eq.s32.totalorder %s16, 1
      %p118 = scmp.ne.s32.totalorder %s113, %s115
      %p119 = scmp.eq.s32.totalorder %s16, 0
      %p120 = por %p118, %p119
      %p121 = scmp.ne.s32.totalorder %s113, %s115
      %p122 = scmp.eq.s32.totalorder %s21, 1
      %p123 = por %p121, %p122
      %p124 = scmp.ne.s32.totalorder %s115, %s116
      %p125 = scmp.eq.s32.totalorder %s21, 0
      %p126 = por %p124, %p125
      %p127 = scmp.ne.s32.totalorder %s115, %s116
      %p128 = scmp.eq.s32.totalorder %s22, 1
      %p129 = por %p127, %p128
      %p131 = scmp.ne.s32.totalorder %s116, %s130
      %p132 = scmp.eq.s32.totalorder %s22, 0
      %p133 = por %p131, %p132
      %s135 = sadd.s32 %s134, 1
      %p138 = scmp.eq.s32.totalorder %s16, 1
      %p139 = scmp.ne.s32.totalorder %s134, %s136
      %p140 = scmp.eq.s32.totalorder %s16, 0
      %p141 = por %p139, %p140
      %p142 = scmp.ne.s32.totalorder %s134, %s136
      %p143 = scmp.eq.s32.totalorder %s21, 1
      %p144 = por %p142, %p143
      %p145 = scmp.ne.s32.totalorder %s136, %s137
      %p146 = scmp.eq.s32.totalorder %s21, 0
      %p147 = por %p145, %p146
      %p148 = scmp.ne.s32.totalorder %s136, %s137
      %p149 = scmp.eq.s32.totalorder %s22, 1
      %p150 = por %p148, %p149
      %p152 = scmp.ne.s32.totalorder %s137, %s151
      %p153 = scmp.eq.s32.totalorder %s22, 0
      %p154 = por %p152, %p153
      %s156 = sadd.s32 %s155, 1
      %p159 = scmp.eq.s32.totalorder %s16, 1
      %p160 = scmp.ne.s32.totalorder %s155, %s157
      %p161 = scmp.eq.s32.totalorder %s16, 0
      %p162 = por %p160, %p161
      %p163 = scmp.ne.s32.totalorder %s155, %s157
      %p164 = scmp.eq.s32.totalorder %s21, 1
      %p165 = por %p163, %p164
      %p166 = scmp.ne.s32.totalorder %s157, %s158
      %p167 = scmp.eq.s32.totalorder %s21, 0
      %p168 = por %p166, %p167
      %p169 = scmp.ne.s32.totalorder %s157, %s158
      %p170 = scmp.eq.s32.totalorder %s22, 1
      %p171 = por %p169, %p170
      %p173 = scmp.ne.s32.totalorder %s158, %s172
      %p174 = scmp.eq.s32.totalorder %s22, 0
      %p175 = por %p173, %p174
      %s176 = ssub.s32 %s16, %s23
      %p177 = scmp.eq.s32.totalorder %s176, 0
      %s179 = sadd.s32 %s178, 1
      %s180 = scalar_select %p177, %s178, %s179
      %p183 = pneg %p177
      %p184 = scmp.eq.s32.totalorder %s16, 1
      %p185 = por %p183, %p184
      %p186 = scmp.ne.s32.totalorder %s178, %s181
      %p187 = scmp.eq.s32.totalorder %s16, 0
      %p188 = por %p186, %p187
      %p189 = scmp.ne.s32.totalorder %s178, %s181
      %p190 = scmp.eq.s32.totalorder %s21, 1
      %p191 = por %p189, %p190
      %p192 = scmp.ne.s32.totalorder %s181, %s182
      %p193 = scmp.eq.s32.totalorder %s21, 0
      %p194 = por %p192, %p193
      %p195 = scmp.ne.s32.totalorder %s181, %s182
      %p196 = scmp.eq.s32.totalorder %s22, 1
      %p197 = por %p195, %p196
      %p199 = scmp.ne.s32.totalorder %s182, %s198
      %p200 = scmp.eq.s32.totalorder %s22, 0
      %p201 = por %p199, %p200
      %p202 = scmp.le.s32.totalorder 1, %s16
      %p203 = scmp.lt.s32.totalorder %s16, 3
      %p204 = pnand %p202, %p203
      %p205 = pneg %p204
      // Predicated region
      $region9: #{cnn2d_block.1} parent=5 // pred_check
        _
      $region10: #{cnn2d_block.1} parent=5 // pred_check_branch
        %207 = sbr.rel (%p204) target = $region12
      $region11: #{cnn2d_block.1} parent=5 // pred_region
        %s208 = ssub.s32 %s16, 1
        // Predicated region
        $region13: #{cnn2d_block.1} parent=11 // pred_check
          %p209 = pneg %p63
        $region14: #{cnn2d_block.1} parent=11 // pred_check_branch
          %211 = sbr.rel (%p209) target = $region16
        $region15: #{cnn2d_block.1} parent=11 // pred_region
          _
        $region16: #{cnn2d_block.1} parent=11 // pred_fallthru
          _
        // Predicated region
        $region17: #{cnn2d_block.1} parent=11 // pred_check
          %p212 = pneg %p84
        $region18: #{cnn2d_block.1} parent=11 // pred_check_branch
          %214 = sbr.rel (%p212) target = $region20
        $region19: #{cnn2d_block.1} parent=11 // pred_region
          _
        $region20: #{cnn2d_block.1} parent=11 // pred_fallthru
          _
        // Predicated region
        $region21: #{cnn2d_block.1} parent=11 // pred_check
          %p215 = pneg %p105
        $region22: #{cnn2d_block.1} parent=11 // pred_check_branch
          %217 = sbr.rel (%p215) target = $region24
        $region23: #{cnn2d_block.1} parent=11 // pred_region
          _
        $region24: #{cnn2d_block.1} parent=11 // pred_fallthru
          _
        // Predicated region
        $region25: #{cnn2d_block.1} parent=11 // pred_check
          %p218 = pneg %p126
        $region26: #{cnn2d_block.1} parent=11 // pred_check_branch
          %220 = sbr.rel (%p218) target = $region28
        $region27: #{cnn2d_block.1} parent=11 // pred_region
          _
        $region28: #{cnn2d_block.1} parent=11 // pred_fallthru
          _
        // Predicated region
        $region29: #{cnn2d_block.1} parent=11 // pred_check
          %p221 = pneg %p147
        $region30: #{cnn2d_block.1} parent=11 // pred_check_branch
          %223 = sbr.rel (%p221) target = $region32
        $region31: #{cnn2d_block.1} parent=11 // pred_region
          _
        $region32: #{cnn2d_block.1} parent=11 // pred_fallthru
          _
        // Predicated region
        $region33: #{cnn2d_block.1} parent=11 // pred_check
          %p224 = pneg %p168
        $region34: #{cnn2d_block.1} parent=11 // pred_check_branch
          %226 = sbr.rel (%p224) target = $region36
        $region35: #{cnn2d_block.1} parent=11 // pred_region
          _
        $region36: #{cnn2d_block.1} parent=11 // pred_fallthru
          _
      $region12: #{cnn2d_block.1} parent=5 // pred_fallthru
        _
      %p227 = scmp.lt.s32.totalorder %s16, 2
      // Predicated region
      $region37: #{cnn2d_block.1} parent=5 // pred_check
        %p228 = pneg %p227
      $region38: #{cnn2d_block.1} parent=5 // pred_check_branch
        %230 = sbr.rel (%p228) target = $region40
      $region39: #{cnn2d_block.1} parent=5 // pred_region
        // Predicated region
        $region41: #{cnn2d_block.1} parent=39 // pred_check
          %p231 = pneg %p36
        $region42: #{cnn2d_block.1} parent=39 // pred_check_branch
          %233 = sbr.rel (%p231) target = $region44
        $region43: #{cnn2d_block.1} parent=39 // pred_region
          %p234 = scmp.lt.s32.totalorder %s16, 1
          %s235 = scalar_select %p234, %s16, 1
          %s236 = smul.addr %s235, 32
          %s237 = smul.addr %s236, 8
          %s238 = scalar_lea.vmem %s0, %s237
        $region44: #{cnn2d_block.1} parent=39 // pred_fallthru
          _
      $region40: #{cnn2d_block.1} parent=5 // pred_fallthru
        _
      %p239 = scmp.le.s32.totalorder 1, %s16
      %p240 = scmp.lt.s32.totalorder %s16, 3
      %p241 = pnand %p239, %p240
      %p242 = pneg %p241
      // Predicated region
      $region45: #{cnn2d_block.1} parent=5 // pred_check
        _
      $region46: #{cnn2d_block.1} parent=5 // pred_check_branch
        %244 = sbr.rel (%p241) target = $region48
      $region47: #{cnn2d_block.1} parent=5 // pred_region
        %s245 = ssub.s32 %s16, 1
        %p246 = scmp.lt.s32.totalorder %s21, 1
        %s247 = scalar_select %p246, %s21, 1
        %s248 = smul.addr %s247, 32
        %s249 = smul.addr %s248, 8
        %s250 = scalar_lea.vmem %s0, %s249
        %p251 = pneg %p42
        %p252 = pneg %p39
        %p253 = pneg %p63
        %p254 = pneg %p60
        %p255 = pneg %p84
        %p256 = pneg %p81
        %p257 = pneg %p105
        %p258 = pneg %p102
        %p259 = pneg %p126
        %p260 = pneg %p123
        %p261 = pneg %p147
        %p262 = pneg %p144
        %p263 = pneg %p168
        %p264 = pneg %p165
        %p265 = pneg %p194
        %p266 = pneg %p191
        %s267 = sand.u32 %s181, 1
        %s268 = scalar_lea.sflag [#allocation7], %s267
        %s269 = sand.u32 %s181, 1
        %s270 = smul.addr %s269, 16
        %s271 = scalar_lea.vmem [#allocation6], %s270
        %p272 = scmp.lt.s32.totalorder %s21, 1
        %s273 = scalar_select %p272, %s21, 1
        %s274 = smul.addr %s273, 32
        %s275 = smul.addr %s274, 8
        %s276 = scalar_lea.vmem %s0, %s275
        %v278 = vld [vmem:[%s276] sm:$0xff]
        %v279 = vld [vmem:[%s276 + $0x8] sm:$0xff]
        %v280 = vld [vmem:[%s276 + $0x10] sm:$0xff]
        %v281 = vld [vmem:[%s276 + $0x18] sm:$0xff]
        %v282 = vld [vmem:[%s276 + $0x20] sm:$0xff]
        %v283 = vld [vmem:[%s276 + $0x28] sm:$0xff]
        %v284 = vld [vmem:[%s276 + $0x30] sm:$0xff]
        %v285 = vld [vmem:[%s276 + $0x38] sm:$0xff]
        %v286 = vld [vmem:[%s276 + $0x40] sm:$0xff]
        %v287 = vld [vmem:[%s276 + $0x48] sm:$0xff]
        %v288 = vld [vmem:[%s276 + $0x50] sm:$0xff]
        %v289 = vld [vmem:[%s276 + $0x58] sm:$0xff]
        %v290 = vld [vmem:[%s276 + $0x60] sm:$0xff]
        %v291 = vld [vmem:[%s276 + $0x68] sm:$0xff]
        %v292 = vld [vmem:[%s276 + $0x70] sm:$0xff]
        %v293 = vld [vmem:[%s276 + $0x78] sm:$0xff]
        %v294 = vld [vmem:[%s276 + $0x80] sm:$0xff]
        %v295 = vld [vmem:[%s276 + $0x88] sm:$0xff]
        %v296 = vld [vmem:[%s276 + $0x90] sm:$0xff]
        %v297 = vld [vmem:[%s276 + $0x98] sm:$0xff]
        %v298 = vld [vmem:[%s276 + $0xa0] sm:$0xff]
        %v299 = vld [vmem:[%s276 + $0xa8] sm:$0xff]
        %v300 = vld [vmem:[%s276 + $0xb0] sm:$0xff]
        %v301 = vld [vmem:[%s276 + $0xb8] sm:$0xff]
        %v302 = vld [vmem:[%s276 + $0xc0] sm:$0xff]
        %v303 = vld [vmem:[%s276 + $0xc8] sm:$0xff]
        %v304 = vld [vmem:[%s276 + $0xd0] sm:$0xff]
        %v305 = vld [vmem:[%s276 + $0xd8] sm:$0xff]
        %v306 = vld [vmem:[%s276 + $0xe0] sm:$0xff]
        %v307 = vld [vmem:[%s276 + $0xe8] sm:$0xff]
        %v308 = vld [vmem:[%s276 + $0xf0] sm:$0xff]
        %v309 = vld [vmem:[%s276 + $0xf8] sm:$0xff]
        %vm310 = vcmask 31744
        %311 = vst.msk [vmem:[#allocation2] sm:$0xff] %vm310, 0.0
        %312 = vst.msk [vmem:[#allocation2 + $0x8] sm:$0xff] %vm310, 0.0
        %vm313 = vcmask 25600
        %314 = vst.msk [vmem:[#allocation2 + $0x10] sm:$0x3] %vm313, 0.0
        %315 = vst.msk [vmem:[#allocation2 + $0x18] sm:$0xff] %vm310, 0.0
        %316 = vst.msk [vmem:[#allocation2 + $0x20] sm:$0xff] %vm310, 0.0
        %317 = vst.msk [vmem:[#allocation2 + $0x28] sm:$0x3] %vm313, 0.0
        %318 = vst.msk [vmem:[#allocation2 + $0x30] sm:$0xff] %vm310, 0.0
        %319 = vst.msk [vmem:[#allocation2 + $0x38] sm:$0xff] %vm310, 0.0
        %320 = vst.msk [vmem:[#allocation2 + $0x40] sm:$0x3] %vm313, 0.0
        %321 = vst.msk [vmem:[#allocation2 + $0x48] sm:$0xff] %vm310, 0.0
        %322 = vst.msk [vmem:[#allocation2 + $0x50] sm:$0xff] %vm310, 0.0
        %323 = vst.msk [vmem:[#allocation2 + $0x58] sm:$0x3] %vm313, 0.0
        %324 = vst.msk [vmem:[#allocation2 + $0x60] sm:$0xff] %vm310, 0.0
        %325 = vst.msk [vmem:[#allocation2 + $0x68] sm:$0xff] %vm310, 0.0
        %326 = vst.msk [vmem:[#allocation2 + $0x70] sm:$0x3] %vm313, 0.0
        %327 = vst.msk [vmem:[#allocation2 + $0x78] sm:$0xff] %vm310, 0.0
        %328 = vst.msk [vmem:[#allocation2 + $0x80] sm:$0xff] %vm310, 0.0
        %329 = vst.msk [vmem:[#allocation2 + $0x88] sm:$0x3] %vm313, 0.0
        %330 = vst.msk [vmem:[#allocation2 + $0x90] sm:$0xff] %vm310, 0.0
        %331 = vst.msk [vmem:[#allocation2 + $0x98] sm:$0xff] %vm310, 0.0
        %332 = vst.msk [vmem:[#allocation2 + $0xa0] sm:$0x3] %vm313, 0.0
        %333 = vst.msk [vmem:[#allocation2 + $0xa8] sm:$0xff] %vm310, 0.0
        %334 = vst.msk [vmem:[#allocation2 + $0xb0] sm:$0xff] %vm310, 0.0
        %335 = vst.msk [vmem:[#allocation2 + $0xb8] sm:$0x3] %vm313, 0.0
        %336 = vst.msk [vmem:[#allocation2 + $0xc0] sm:$0xff] %vm310, 0.0
        %337 = vst.msk [vmem:[#allocation2 + $0xc8] sm:$0xff] %vm310, 0.0
        %338 = vst.msk [vmem:[#allocation2 + $0xd0] sm:$0x3] %vm313, 0.0
        %339 = vst.msk [vmem:[#allocation2 + $0xd8] sm:$0xff] %vm310, 0.0
        %340 = vst.msk [vmem:[#allocation2 + $0xe0] sm:$0xff] %vm310, 0.0
        %341 = vst.msk [vmem:[#allocation2 + $0xe8] sm:$0x3] %vm313, 0.0
        %342 = vst.msk [vmem:[#allocation2 + $0xf0] sm:$0xff] %vm310, 0.0
        %343 = vst.msk [vmem:[#allocation2 + $0xf8] sm:$0xff] %vm310, 0.0
        %344 = vst.msk [vmem:[#allocation2 + $0x100] sm:$0x3] %vm313, 0.0
        %345 = vst.msk [vmem:[#allocation2 + $0x108] sm:$0xff] %vm310, 0.0
        %346 = vst.msk [vmem:[#allocation2 + $0x110] sm:$0xff] %vm310, 0.0
        %347 = vst.msk [vmem:[#allocation2 + $0x118] sm:$0x3] %vm313, 0.0
        %348 = vst.msk [vmem:[#allocation2 + $0x120] sm:$0xff] %vm310, 0.0
        %349 = vst.msk [vmem:[#allocation2 + $0x128] sm:$0xff] %vm310, 0.0
        %350 = vst.msk [vmem:[#allocation2 + $0x130] sm:$0x3] %vm313, 0.0
        %351 = vst.msk [vmem:[#allocation2 + $0x138] sm:$0xff] %vm310, 0.0
        %352 = vst.msk [vmem:[#allocation2 + $0x140] sm:$0xff] %vm310, 0.0
        %353 = vst.msk [vmem:[#allocation2 + $0x148] sm:$0x3] %vm313, 0.0
        %354 = vst.msk [vmem:[#allocation2 + $0x150] sm:$0xff] %vm310, 0.0
        %355 = vst.msk [vmem:[#allocation2 + $0x158] sm:$0xff] %vm310, 0.0
        %356 = vst.msk [vmem:[#allocation2 + $0x160] sm:$0x3] %vm313, 0.0
        %357 = vst.msk [vmem:[#allocation2 + $0x168] sm:$0xff] %vm310, 0.0
        %358 = vst.msk [vmem:[#allocation2 + $0x170] sm:$0xff] %vm310, 0.0
        %359 = vst.msk [vmem:[#allocation2 + $0x178] sm:$0x3] %vm313, 0.0
        %360 = vst.msk [vmem:[#allocation2 + $0x180] sm:$0xff] %vm310, 0.0
        %361 = vst.msk [vmem:[#allocation2 + $0x188] sm:$0xff] %vm310, 0.0
        %362 = vst.msk [vmem:[#allocation2 + $0x190] sm:$0x3] %vm313, 0.0
        %363 = vst.msk [vmem:[#allocation2 + $0x198] sm:$0xff] %vm310, 0.0
        %364 = vst.msk [vmem:[#allocation2 + $0x1a0] sm:$0xff] %vm310, 0.0
        %365 = vst.msk [vmem:[#allocation2 + $0x1a8] sm:$0x3] %vm313, 0.0
        %s366 = scalar_lea.vmem [#allocation2], 24
        %367 = vst.msk [vmem:[%s366 + $0x1] sm:$0xff] %vm310, %v278
        %368 = vst.msk [vmem:[%s366 + $0x9] sm:$0xff] %vm310, %v279
        %369 = vst.msk [vmem:[%s366 + $0x19] sm:$0xff] %vm310, %v280
        %370 = vst.msk [vmem:[%s366 + $0x21] sm:$0xff] %vm310, %v281
        %371 = vst.msk [vmem:[%s366 + $0x31] sm:$0xff] %vm310, %v282
        %372 = vst.msk [vmem:[%s366 + $0x39] sm:$0xff] %vm310, %v283
        %373 = vst.msk [vmem:[%s366 + $0x49] sm:$0xff] %vm310, %v284
        %374 = vst.msk [vmem:[%s366 + $0x51] sm:$0xff] %vm310, %v285
        %375 = vst.msk [vmem:[%s366 + $0x61] sm:$0xff] %vm310, %v286
        %376 = vst.msk [vmem:[%s366 + $0x69] sm:$0xff] %vm310, %v287
        %377 = vst.msk [vmem:[%s366 + $0x79] sm:$0xff] %vm310, %v288
        %378 = vst.msk [vmem:[%s366 + $0x81] sm:$0xff] %vm310, %v289
        %379 = vst.msk [vmem:[%s366 + $0x91] sm:$0xff] %vm310, %v290
        %380 = vst.msk [vmem:[%s366 + $0x99] sm:$0xff] %vm310, %v291
        %381 = vst.msk [vmem:[%s366 + $0xa9] sm:$0xff] %vm310, %v292
        %382 = vst.msk [vmem:[%s366 + $0xb1] sm:$0xff] %vm310, %v293
        %383 = vst.msk [vmem:[%s366 + $0xc1] sm:$0xff] %vm310, %v294
        %384 = vst.msk [vmem:[%s366 + $0xc9] sm:$0xff] %vm310, %v295
        %385 = vst.msk [vmem:[%s366 + $0xd9] sm:$0xff] %vm310, %v296
        %386 = vst.msk [vmem:[%s366 + $0xe1] sm:$0xff] %vm310, %v297
        %387 = vst.msk [vmem:[%s366 + $0xf1] sm:$0xff] %vm310, %v298
        %388 = vst.msk [vmem:[%s366 + $0xf9] sm:$0xff] %vm310, %v299
        %389 = vst.msk [vmem:[%s366 + $0x109] sm:$0xff] %vm310, %v300
        %390 = vst.msk [vmem:[%s366 + $0x111] sm:$0xff] %vm310, %v301
        %391 = vst.msk [vmem:[%s366 + $0x121] sm:$0xff] %vm310, %v302
        %392 = vst.msk [vmem:[%s366 + $0x129] sm:$0xff] %vm310, %v303
        %393 = vst.msk [vmem:[%s366 + $0x139] sm:$0xff] %vm310, %v304
        %394 = vst.msk [vmem:[%s366 + $0x141] sm:$0xff] %vm310, %v305
        %395 = vst.msk [vmem:[%s366 + $0x151] sm:$0xff] %vm310, %v306
        %396 = vst.msk [vmem:[%s366 + $0x159] sm:$0xff] %vm310, %v307
        %397 = vst.msk [vmem:[%s366 + $0x169] sm:$0xff] %vm310, %v308
        %398 = vst.msk [vmem:[%s366 + $0x171] sm:$0xff] %vm310, %v309
        %v399 = vld [vmem:[#allocation2] sm:$0xff]
        %v400 = vld [vmem:[#allocation2 + $0x8] sm:$0xff]
        %v401 = vld [vmem:[#allocation2 + $0x18] sm:$0xff]
        %v402 = vld [vmem:[#allocation2 + $0x20] sm:$0xff]
        %v403 = vld [vmem:[#allocation2 + $0x30] sm:$0xff]
        %v404 = vld [vmem:[#allocation2 + $0x38] sm:$0xff]
        %v405 = vld [vmem:[#allocation2 + $0x48] sm:$0xff]
        %v406 = vld [vmem:[#allocation2 + $0x50] sm:$0xff]
        %v407 = vld [vmem:[#allocation2 + $0x60] sm:$0xff]
        %v408 = vld [vmem:[#allocation2 + $0x68] sm:$0xff]
        %v409 = vld [vmem:[#allocation2 + $0x78] sm:$0xff]
        %v410 = vld [vmem:[#allocation2 + $0x80] sm:$0xff]
        %v411 = vld [vmem:[#allocation2 + $0x90] sm:$0xff]
        %v412 = vld [vmem:[#allocation2 + $0x98] sm:$0xff]
        %v413 = vld [vmem:[#allocation2 + $0xa8] sm:$0xff]
        %v414 = vld [vmem:[#allocation2 + $0xb0] sm:$0xff]
        %v415 = vld [vmem:[#allocation2 + $0xc0] sm:$0xff]
        %v416 = vld [vmem:[#allocation2 + $0xc8] sm:$0xff]
        %v417 = vld [vmem:[#allocation2 + $0xd8] sm:$0xff]
        %v418 = vld [vmem:[#allocation2 + $0xe0] sm:$0xff]
        %v419 = vld [vmem:[#allocation2 + $0xf0] sm:$0xff]
        %v420 = vld [vmem:[#allocation2 + $0xf8] sm:$0xff]
        %v421 = vld [vmem:[#allocation2 + $0x108] sm:$0xff]
        %v422 = vld [vmem:[#allocation2 + $0x110] sm:$0xff]
        %v423 = vld [vmem:[#allocation2 + $0x120] sm:$0xff]
        %v424 = vld [vmem:[#allocation2 + $0x128] sm:$0xff]
        %v425 = vld [vmem:[#allocation2 + $0x138] sm:$0xff]
        %v426 = vld [vmem:[#allocation2 + $0x140] sm:$0xff]
        %v427 = vld [vmem:[#allocation2 + $0x150] sm:$0xff]
        %v428 = vld [vmem:[#allocation2 + $0x158] sm:$0xff]
        %v429 = vld [vmem:[#allocation2 + $0x168] sm:$0xff]
        %v430 = vld [vmem:[#allocation2 + $0x170] sm:$0xff]
        %v431 = vld [vmem:[#allocation2 + $0x1] sm:$0xff]
        %v432 = vld [vmem:[#allocation2 + $0x9] sm:$0xff]
        %v433 = vld [vmem:[#allocation2 + $0x19] sm:$0xff]
        %v434 = vld [vmem:[#allocation2 + $0x21] sm:$0xff]
        %v435 = vld [vmem:[#allocation2 + $0x31] sm:$0xff]
        %v436 = vld [vmem:[#allocation2 + $0x39] sm:$0xff]
        %v437 = vld [vmem:[#allocation2 + $0x49] sm:$0xff]
        %v438 = vld [vmem:[#allocation2 + $0x51] sm:$0xff]
        %v439 = vld [vmem:[#allocation2 + $0x61] sm:$0xff]
        %v440 = vld [vmem:[#allocation2 + $0x69] sm:$0xff]
        %v441 = vld [vmem:[#allocation2 + $0x79] sm:$0xff]
        %v442 = vld [vmem:[#allocation2 + $0x81] sm:$0xff]
        %v443 = vld [vmem:[#allocation2 + $0x91] sm:$0xff]
        %v444 = vld [vmem:[#allocation2 + $0x99] sm:$0xff]
        %v445 = vld [vmem:[#allocation2 + $0xa9] sm:$0xff]
        %v446 = vld [vmem:[#allocation2 + $0xb1] sm:$0xff]
        %v447 = vld [vmem:[#allocation2 + $0xc1] sm:$0xff]
        %v448 = vld [vmem:[#allocation2 + $0xc9] sm:$0xff]
        %v449 = vld [vmem:[#allocation2 + $0xd9] sm:$0xff]
        %v450 = vld [vmem:[#allocation2 + $0xe1] sm:$0xff]
        %v451 = vld [vmem:[#allocation2 + $0xf1] sm:$0xff]
        %v452 = vld [vmem:[#allocation2 + $0xf9] sm:$0xff]
        %v453 = vld [vmem:[#allocation2 + $0x109] sm:$0xff]
        %v454 = vld [vmem:[#allocation2 + $0x111] sm:$0xff]
        %v455 = vld [vmem:[#allocation2 + $0x121] sm:$0xff]
        %v456 = vld [vmem:[#allocation2 + $0x129] sm:$0xff]
        %v457 = vld [vmem:[#allocation2 + $0x139] sm:$0xff]
        %v458 = vld [vmem:[#allocation2 + $0x141] sm:$0xff]
        %v459 = vld [vmem:[#allocation2 + $0x151] sm:$0xff]
        %v460 = vld [vmem:[#allocation2 + $0x159] sm:$0xff]
        %v461 = vld [vmem:[#allocation2 + $0x169] sm:$0xff]
        %v462 = vld [vmem:[#allocation2 + $0x171] sm:$0xff]
        %v463 = vld [vmem:[#allocation2 + $0x2] sm:$0xff]
        %v464 = vld [vmem:[#allocation2 + $0xa] sm:$0xff]
        %v465 = vld [vmem:[#allocation2 + $0x1a] sm:$0xff]
        %v466 = vld [vmem:[#allocation2 + $0x22] sm:$0xff]
        %v467 = vld [vmem:[#allocation2 + $0x32] sm:$0xff]
        %v468 = vld [vmem:[#allocation2 + $0x3a] sm:$0xff]
        %v469 = vld [vmem:[#allocation2 + $0x4a] sm:$0xff]
        %v470 = vld [vmem:[#allocation2 + $0x52] sm:$0xff]
        %v471 = vld [vmem:[#allocation2 + $0x62] sm:$0xff]
        %v472 = vld [vmem:[#allocation2 + $0x6a] sm:$0xff]
        %v473 = vld [vmem:[#allocation2 + $0x7a] sm:$0xff]
        %v474 = vld [vmem:[#allocation2 + $0x82] sm:$0xff]
        %v475 = vld [vmem:[#allocation2 + $0x92] sm:$0xff]
        %v476 = vld [vmem:[#allocation2 + $0x9a] sm:$0xff]
        %v477 = vld [vmem:[#allocation2 + $0xaa] sm:$0xff]
        %v478 = vld [vmem:[#allocation2 + $0xb2] sm:$0xff]
        %v479 = vld [vmem:[#allocation2 + $0xc2] sm:$0xff]
        %v480 = vld [vmem:[#allocation2 + $0xca] sm:$0xff]
        %v481 = vld [vmem:[#allocation2 + $0xda] sm:$0xff]
        %v482 = vld [vmem:[#allocation2 + $0xe2] sm:$0xff]
        %v483 = vld [vmem:[#allocation2 + $0xf2] sm:$0xff]
        %v484 = vld [vmem:[#allocation2 + $0xfa] sm:$0xff]
        %v485 = vld [vmem:[#allocation2 + $0x10a] sm:$0xff]
        %v486 = vld [vmem:[#allocation2 + $0x112] sm:$0xff]
        %v487 = vld [vmem:[#allocation2 + $0x122] sm:$0xff]
        %v488 = vld [vmem:[#allocation2 + $0x12a] sm:$0xff]
        %v489 = vld [vmem:[#allocation2 + $0x13a] sm:$0xff]
        %v490 = vld [vmem:[#allocation2 + $0x142] sm:$0xff]
        %v491 = vld [vmem:[#allocation2 + $0x152] sm:$0xff]
        %v492 = vld [vmem:[#allocation2 + $0x15a] sm:$0xff]
        %v493 = vld [vmem:[#allocation2 + $0x16a] sm:$0xff]
        %v494 = vld [vmem:[#allocation2 + $0x172] sm:$0xff]
        %v495 = vld [vmem:[%s366] sm:$0xff]
        %v496 = vld [vmem:[%s366 + $0x8] sm:$0xff]
        %v497 = vld [vmem:[%s366 + $0x18] sm:$0xff]
        %v498 = vld [vmem:[%s366 + $0x20] sm:$0xff]
        %v499 = vld [vmem:[%s366 + $0x30] sm:$0xff]
        %v500 = vld [vmem:[%s366 + $0x38] sm:$0xff]
        %v501 = vld [vmem:[%s366 + $0x48] sm:$0xff]
        %v502 = vld [vmem:[%s366 + $0x50] sm:$0xff]
        %v503 = vld [vmem:[%s366 + $0x60] sm:$0xff]
        %v504 = vld [vmem:[%s366 + $0x68] sm:$0xff]
        %v505 = vld [vmem:[%s366 + $0x78] sm:$0xff]
        %v506 = vld [vmem:[%s366 + $0x80] sm:$0xff]
        %v507 = vld [vmem:[%s366 + $0x90] sm:$0xff]
        %v508 = vld [vmem:[%s366 + $0x98] sm:$0xff]
        %v509 = vld [vmem:[%s366 + $0xa8] sm:$0xff]
        %v510 = vld [vmem:[%s366 + $0xb0] sm:$0xff]
        %v511 = vld [vmem:[%s366 + $0xc0] sm:$0xff]
        %v512 = vld [vmem:[%s366 + $0xc8] sm:$0xff]
        %v513 = vld [vmem:[%s366 + $0xd8] sm:$0xff]
        %v514 = vld [vmem:[%s366 + $0xe0] sm:$0xff]
        %v515 = vld [vmem:[%s366 + $0xf0] sm:$0xff]
        %v516 = vld [vmem:[%s366 + $0xf8] sm:$0xff]
        %v517 = vld [vmem:[%s366 + $0x108] sm:$0xff]
        %v518 = vld [vmem:[%s366 + $0x110] sm:$0xff]
        %v519 = vld [vmem:[%s366 + $0x120] sm:$0xff]
        %v520 = vld [vmem:[%s366 + $0x128] sm:$0xff]
        %v521 = vld [vmem:[%s366 + $0x138] sm:$0xff]
        %v522 = vld [vmem:[%s366 + $0x140] sm:$0xff]
        %v523 = vld [vmem:[%s366 + $0x150] sm:$0xff]
        %v524 = vld [vmem:[%s366 + $0x158] sm:$0xff]
        %v525 = vld [vmem:[%s366 + $0x168] sm:$0xff]
        %v526 = vld [vmem:[%s366 + $0x170] sm:$0xff]
        %v527 = vld [vmem:[%s366 + $0x1] sm:$0xff]
        %v528 = vld [vmem:[%s366 + $0x9] sm:$0xff]
        %v529 = vld [vmem:[%s366 + $0x19] sm:$0xff]
        %v530 = vld [vmem:[%s366 + $0x21] sm:$0xff]
        %v531 = vld [vmem:[%s366 + $0x31] sm:$0xff]
        %v532 = vld [vmem:[%s366 + $0x39] sm:$0xff]
        %v533 = vld [vmem:[%s366 + $0x49] sm:$0xff]
        %v534 = vld [vmem:[%s366 + $0x51] sm:$0xff]
        %v535 = vld [vmem:[%s366 + $0x61] sm:$0xff]
        %v536 = vld [vmem:[%s366 + $0x69] sm:$0xff]
        %v537 = vld [vmem:[%s366 + $0x79] sm:$0xff]
        %v538 = vld [vmem:[%s366 + $0x81] sm:$0xff]
        %v539 = vld [vmem:[%s366 + $0x91] sm:$0xff]
        %v540 = vld [vmem:[%s366 + $0x99] sm:$0xff]
        %v541 = vld [vmem:[%s366 + $0xa9] sm:$0xff]
        %v542 = vld [vmem:[%s366 + $0xb1] sm:$0xff]
        %v543 = vld [vmem:[%s366 + $0xc1] sm:$0xff]
        %v544 = vld [vmem:[%s366 + $0xc9] sm:$0xff]
        %v545 = vld [vmem:[%s366 + $0xd9] sm:$0xff]
        %v546 = vld [vmem:[%s366 + $0xe1] sm:$0xff]
        %v547 = vld [vmem:[%s366 + $0xf1] sm:$0xff]
        %v548 = vld [vmem:[%s366 + $0xf9] sm:$0xff]
        %v549 = vld [vmem:[%s366 + $0x109] sm:$0xff]
        %v550 = vld [vmem:[%s366 + $0x111] sm:$0xff]
        %v551 = vld [vmem:[%s366 + $0x121] sm:$0xff]
        %v552 = vld [vmem:[%s366 + $0x129] sm:$0xff]
        %v553 = vld [vmem:[%s366 + $0x139] sm:$0xff]
        %v554 = vld [vmem:[%s366 + $0x141] sm:$0xff]
        %v555 = vld [vmem:[%s366 + $0x151] sm:$0xff]
        %v556 = vld [vmem:[%s366 + $0x159] sm:$0xff]
        %v557 = vld [vmem:[%s366 + $0x169] sm:$0xff]
        %v558 = vld [vmem:[%s366 + $0x171] sm:$0xff]
        %v559 = vld [vmem:[%s366 + $0x2] sm:$0xff]
        %v560 = vld [vmem:[%s366 + $0xa] sm:$0xff]
        %v561 = vld [vmem:[%s366 + $0x1a] sm:$0xff]
        %v562 = vld [vmem:[%s366 + $0x22] sm:$0xff]
        %v563 = vld [vmem:[%s366 + $0x32] sm:$0xff]
        %v564 = vld [vmem:[%s366 + $0x3a] sm:$0xff]
        %v565 = vld [vmem:[%s366 + $0x4a] sm:$0xff]
        %v566 = vld [vmem:[%s366 + $0x52] sm:$0xff]
        %v567 = vld [vmem:[%s366 + $0x62] sm:$0xff]
        %v568 = vld [vmem:[%s366 + $0x6a] sm:$0xff]
        %v569 = vld [vmem:[%s366 + $0x7a] sm:$0xff]
        %v570 = vld [vmem:[%s366 + $0x82] sm:$0xff]
        %v571 = vld [vmem:[%s366 + $0x92] sm:$0xff]
        %v572 = vld [vmem:[%s366 + $0x9a] sm:$0xff]
        %v573 = vld [vmem:[%s366 + $0xaa] sm:$0xff]
        %v574 = vld [vmem:[%s366 + $0xb2] sm:$0xff]
        %v575 = vld [vmem:[%s366 + $0xc2] sm:$0xff]
        %v576 = vld [vmem:[%s366 + $0xca] sm:$0xff]
        %v577 = vld [vmem:[%s366 + $0xda] sm:$0xff]
        %v578 = vld [vmem:[%s366 + $0xe2] sm:$0xff]
        %v579 = vld [vmem:[%s366 + $0xf2] sm:$0xff]
        %v580 = vld [vmem:[%s366 + $0xfa] sm:$0xff]
        %v581 = vld [vmem:[%s366 + $0x10a] sm:$0xff]
        %v582 = vld [vmem:[%s366 + $0x112] sm:$0xff]
        %v583 = vld [vmem:[%s366 + $0x122] sm:$0xff]
        %v584 = vld [vmem:[%s366 + $0x12a] sm:$0xff]
        %v585 = vld [vmem:[%s366 + $0x13a] sm:$0xff]
        %v586 = vld [vmem:[%s366 + $0x142] sm:$0xff]
        %v587 = vld [vmem:[%s366 + $0x152] sm:$0xff]
        %v588 = vld [vmem:[%s366 + $0x15a] sm:$0xff]
        %v589 = vld [vmem:[%s366 + $0x16a] sm:$0xff]
        %v590 = vld [vmem:[%s366 + $0x172] sm:$0xff]
        %s591 = scalar_lea.vmem [#allocation2], 48
        %v592 = vld [vmem:[%s591] sm:$0xff]
        %v593 = vld [vmem:[%s591 + $0x8] sm:$0xff]
        %v594 = vld [vmem:[%s591 + $0x18] sm:$0xff]
        %v595 = vld [vmem:[%s591 + $0x20] sm:$0xff]
        %v596 = vld [vmem:[%s591 + $0x30] sm:$0xff]
        %v597 = vld [vmem:[%s591 + $0x38] sm:$0xff]
        %v598 = vld [vmem:[%s591 + $0x48] sm:$0xff]
        %v599 = vld [vmem:[%s591 + $0x50] sm:$0xff]
        %v600 = vld [vmem:[%s591 + $0x60] sm:$0xff]
        %v601 = vld [vmem:[%s591 + $0x68] sm:$0xff]
        %v602 = vld [vmem:[%s591 + $0x78] sm:$0xff]
        %v603 = vld [vmem:[%s591 + $0x80] sm:$0xff]
        %v604 = vld [vmem:[%s591 + $0x90] sm:$0xff]
        %v605 = vld [vmem:[%s591 + $0x98] sm:$0xff]
        %v606 = vld [vmem:[%s591 + $0xa8] sm:$0xff]
        %v607 = vld [vmem:[%s591 + $0xb0] sm:$0xff]
        %v608 = vld [vmem:[%s591 + $0xc0] sm:$0xff]
        %v609 = vld [vmem:[%s591 + $0xc8] sm:$0xff]
        %v610 = vld [vmem:[%s591 + $0xd8] sm:$0xff]
        %v611 = vld [vmem:[%s591 + $0xe0] sm:$0xff]
        %v612 = vld [vmem:[%s591 + $0xf0] sm:$0xff]
        %v613 = vld [vmem:[%s591 + $0xf8] sm:$0xff]
        %v614 = vld [vmem:[%s591 + $0x108] sm:$0xff]
        %v615 = vld [vmem:[%s591 + $0x110] sm:$0xff]
        %v616 = vld [vmem:[%s591 + $0x120] sm:$0xff]
        %v617 = vld [vmem:[%s591 + $0x128] sm:$0xff]
        %v618 = vld [vmem:[%s591 + $0x138] sm:$0xff]
        %v619 = vld [vmem:[%s591 + $0x140] sm:$0xff]
        %v620 = vld [vmem:[%s591 + $0x150] sm:$0xff]
        %v621 = vld [vmem:[%s591 + $0x158] sm:$0xff]
        %v622 = vld [vmem:[%s591 + $0x168] sm:$0xff]
        %v623 = vld [vmem:[%s591 + $0x170] sm:$0xff]
        %v624 = vld [vmem:[%s591 + $0x1] sm:$0xff]
        %v625 = vld [vmem:[%s591 + $0x9] sm:$0xff]
        %v626 = vld [vmem:[%s591 + $0x19] sm:$0xff]
        %v627 = vld [vmem:[%s591 + $0x21] sm:$0xff]
        %v628 = vld [vmem:[%s591 + $0x31] sm:$0xff]
        %v629 = vld [vmem:[%s591 + $0x39] sm:$0xff]
        %v630 = vld [vmem:[%s591 + $0x49] sm:$0xff]
        %v631 = vld [vmem:[%s591 + $0x51] sm:$0xff]
        %v632 = vld [vmem:[%s591 + $0x61] sm:$0xff]
        %v633 = vld [vmem:[%s591 + $0x69] sm:$0xff]
        %v634 = vld [vmem:[%s591 + $0x79] sm:$0xff]
        %v635 = vld [vmem:[%s591 + $0x81] sm:$0xff]
        %v636 = vld [vmem:[%s591 + $0x91] sm:$0xff]
        %v637 = vld [vmem:[%s591 + $0x99] sm:$0xff]
        %v638 = vld [vmem:[%s591 + $0xa9] sm:$0xff]
        %v639 = vld [vmem:[%s591 + $0xb1] sm:$0xff]
        %v640 = vld [vmem:[%s591 + $0xc1] sm:$0xff]
        %v641 = vld [vmem:[%s591 + $0xc9] sm:$0xff]
        %v642 = vld [vmem:[%s591 + $0xd9] sm:$0xff]
        %v643 = vld [vmem:[%s591 + $0xe1] sm:$0xff]
        %v644 = vld [vmem:[%s591 + $0xf1] sm:$0xff]
        %v645 = vld [vmem:[%s591 + $0xf9] sm:$0xff]
        %v646 = vld [vmem:[%s591 + $0x109] sm:$0xff]
        %v647 = vld [vmem:[%s591 + $0x111] sm:$0xff]
        %v648 = vld [vmem:[%s591 + $0x121] sm:$0xff]
        %v649 = vld [vmem:[%s591 + $0x129] sm:$0xff]
        %v650 = vld [vmem:[%s591 + $0x139] sm:$0xff]
        %v651 = vld [vmem:[%s591 + $0x141] sm:$0xff]
        %v652 = vld [vmem:[%s591 + $0x151] sm:$0xff]
        %v653 = vld [vmem:[%s591 + $0x159] sm:$0xff]
        %v654 = vld [vmem:[%s591 + $0x169] sm:$0xff]
        %v655 = vld [vmem:[%s591 + $0x171] sm:$0xff]
        %v656 = vld [vmem:[%s591 + $0x2] sm:$0xff]
        %v657 = vld [vmem:[%s591 + $0xa] sm:$0xff]
        %v658 = vld [vmem:[%s591 + $0x1a] sm:$0xff]
        %v659 = vld [vmem:[%s591 + $0x22] sm:$0xff]
        %v660 = vld [vmem:[%s591 + $0x32] sm:$0xff]
        %v661 = vld [vmem:[%s591 + $0x3a] sm:$0xff]
        %v662 = vld [vmem:[%s591 + $0x4a] sm:$0xff]
        %v663 = vld [vmem:[%s591 + $0x52] sm:$0xff]
        %v664 = vld [vmem:[%s591 + $0x62] sm:$0xff]
        %v665 = vld [vmem:[%s591 + $0x6a] sm:$0xff]
        %v666 = vld [vmem:[%s591 + $0x7a] sm:$0xff]
        %v667 = vld [vmem:[%s591 + $0x82] sm:$0xff]
        %v668 = vld [vmem:[%s591 + $0x92] sm:$0xff]
        %v669 = vld [vmem:[%s591 + $0x9a] sm:$0xff]
        %v670 = vld [vmem:[%s591 + $0xaa] sm:$0xff]
        %v671 = vld [vmem:[%s591 + $0xb2] sm:$0xff]
        %v672 = vld [vmem:[%s591 + $0xc2] sm:$0xff]
        %v673 = vld [vmem:[%s591 + $0xca] sm:$0xff]
        %v674 = vld [vmem:[%s591 + $0xda] sm:$0xff]
        %v675 = vld [vmem:[%s591 + $0xe2] sm:$0xff]
        %v676 = vld [vmem:[%s591 + $0xf2] sm:$0xff]
        %v677 = vld [vmem:[%s591 + $0xfa] sm:$0xff]
        %v678 = vld [vmem:[%s591 + $0x10a] sm:$0xff]
        %v679 = vld [vmem:[%s591 + $0x112] sm:$0xff]
        %v680 = vld [vmem:[%s591 + $0x122] sm:$0xff]
        %v681 = vld [vmem:[%s591 + $0x12a] sm:$0xff]
        %v682 = vld [vmem:[%s591 + $0x13a] sm:$0xff]
        %v683 = vld [vmem:[%s591 + $0x142] sm:$0xff]
        %v684 = vld [vmem:[%s591 + $0x152] sm:$0xff]
        %v685 = vld [vmem:[%s591 + $0x15a] sm:$0xff]
        %v686 = vld [vmem:[%s591 + $0x16a] sm:$0xff]
        %v687 = vld [vmem:[%s591 + $0x172] sm:$0xff]
        %720 = vrot.lane.b32.xlu0 %v431, 4
        %v721 = vpop.permute.xlu0 %720
        %722 = vrot.lane.b32.xlu0 %v432, 4
        %v723 = vpop.permute.xlu0 %722
        %724 = vrot.lane.b32.xlu0 %v433, 4
        %v725 = vpop.permute.xlu0 %724
        %726 = vrot.lane.b32.xlu0 %v434, 4
        %v727 = vpop.permute.xlu0 %726
        %728 = vrot.lane.b32.xlu0 %v435, 4
        %v729 = vpop.permute.xlu0 %728
        %730 = vrot.lane.b32.xlu0 %v436, 4
        %v731 = vpop.permute.xlu0 %730
        %732 = vrot.lane.b32.xlu0 %v437, 4
        %v733 = vpop.permute.xlu0 %732
        %734 = vrot.lane.b32.xlu0 %v438, 4
        %v735 = vpop.permute.xlu0 %734
        %736 = vrot.lane.b32.xlu0 %v439, 4
        %v737 = vpop.permute.xlu0 %736
        %738 = vrot.lane.b32.xlu0 %v440, 4
        %v739 = vpop.permute.xlu0 %738
        %740 = vrot.lane.b32.xlu0 %v441, 4
        %v741 = vpop.permute.xlu0 %740
        %742 = vrot.lane.b32.xlu0 %v442, 4
        %v743 = vpop.permute.xlu0 %742
        %744 = vrot.lane.b32.xlu0 %v443, 4
        %v745 = vpop.permute.xlu0 %744
        %746 = vrot.lane.b32.xlu0 %v444, 4
        %v747 = vpop.permute.xlu0 %746
        %748 = vrot.lane.b32.xlu0 %v445, 4
        %v749 = vpop.permute.xlu0 %748
        %750 = vrot.lane.b32.xlu0 %v446, 4
        %v751 = vpop.permute.xlu0 %750
        %752 = vrot.lane.b32.xlu0 %v447, 4
        %v753 = vpop.permute.xlu0 %752
        %754 = vrot.lane.b32.xlu0 %v448, 4
        %v755 = vpop.permute.xlu0 %754
        %756 = vrot.lane.b32.xlu0 %v449, 4
        %v757 = vpop.permute.xlu0 %756
        %758 = vrot.lane.b32.xlu0 %v450, 4
        %v759 = vpop.permute.xlu0 %758
        %760 = vrot.lane.b32.xlu0 %v451, 4
        %v761 = vpop.permute.xlu0 %760
        %762 = vrot.lane.b32.xlu0 %v452, 4
        %v763 = vpop.permute.xlu0 %762
        %764 = vrot.lane.b32.xlu0 %v453, 4
        %v765 = vpop.permute.xlu0 %764
        %766 = vrot.lane.b32.xlu0 %v454, 4
        %v767 = vpop.permute.xlu0 %766
        %768 = vrot.lane.b32.xlu0 %v455, 4
        %v769 = vpop.permute.xlu0 %768
        %770 = vrot.lane.b32.xlu0 %v456, 4
        %v771 = vpop.permute.xlu0 %770
        %772 = vrot.lane.b32.xlu0 %v457, 4
        %v773 = vpop.permute.xlu0 %772
        %774 = vrot.lane.b32.xlu0 %v458, 4
        %v775 = vpop.permute.xlu0 %774
        %776 = vrot.lane.b32.xlu0 %v459, 4
        %v777 = vpop.permute.xlu0 %776
        %778 = vrot.lane.b32.xlu0 %v460, 4
        %v779 = vpop.permute.xlu0 %778
        %780 = vrot.lane.b32.xlu0 %v461, 4
        %v781 = vpop.permute.xlu0 %780
        %782 = vrot.lane.b32.xlu0 %v462, 4
        %v783 = vpop.permute.xlu0 %782
        %848 = vrot.lane.b32.xlu0 %v463, 8
        %v849 = vpop.permute.xlu0 %848
        %850 = vrot.lane.b32.xlu0 %v464, 8
        %v851 = vpop.permute.xlu0 %850
        %852 = vrot.lane.b32.xlu0 %v465, 8
        %v853 = vpop.permute.xlu0 %852
        %854 = vrot.lane.b32.xlu0 %v466, 8
        %v855 = vpop.permute.xlu0 %854
        %856 = vrot.lane.b32.xlu0 %v467, 8
        %v857 = vpop.permute.xlu0 %856
        %858 = vrot.lane.b32.xlu0 %v468, 8
        %v859 = vpop.permute.xlu0 %858
        %860 = vrot.lane.b32.xlu0 %v469, 8
        %v861 = vpop.permute.xlu0 %860
        %862 = vrot.lane.b32.xlu0 %v470, 8
        %v863 = vpop.permute.xlu0 %862
        %864 = vrot.lane.b32.xlu0 %v471, 8
        %v865 = vpop.permute.xlu0 %864
        %866 = vrot.lane.b32.xlu0 %v472, 8
        %v867 = vpop.permute.xlu0 %866
        %868 = vrot.lane.b32.xlu0 %v473, 8
        %v869 = vpop.permute.xlu0 %868
        %870 = vrot.lane.b32.xlu0 %v474, 8
        %v871 = vpop.permute.xlu0 %870
        %872 = vrot.lane.b32.xlu0 %v475, 8
        %v873 = vpop.permute.xlu0 %872
        %874 = vrot.lane.b32.xlu0 %v476, 8
        %v875 = vpop.permute.xlu0 %874
        %876 = vrot.lane.b32.xlu0 %v477, 8
        %v877 = vpop.permute.xlu0 %876
        %878 = vrot.lane.b32.xlu0 %v478, 8
        %v879 = vpop.permute.xlu0 %878
        %880 = vrot.lane.b32.xlu0 %v479, 8
        %v881 = vpop.permute.xlu0 %880
        %882 = vrot.lane.b32.xlu0 %v480, 8
        %v883 = vpop.permute.xlu0 %882
        %884 = vrot.lane.b32.xlu0 %v481, 8
        %v885 = vpop.permute.xlu0 %884
        %886 = vrot.lane.b32.xlu0 %v482, 8
        %v887 = vpop.permute.xlu0 %886
        %888 = vrot.lane.b32.xlu0 %v483, 8
        %v889 = vpop.permute.xlu0 %888
        %890 = vrot.lane.b32.xlu0 %v484, 8
        %v891 = vpop.permute.xlu0 %890
        %892 = vrot.lane.b32.xlu0 %v485, 8
        %v893 = vpop.permute.xlu0 %892
        %894 = vrot.lane.b32.xlu0 %v486, 8
        %v895 = vpop.permute.xlu0 %894
        %896 = vrot.lane.b32.xlu0 %v487, 8
        %v897 = vpop.permute.xlu0 %896
        %898 = vrot.lane.b32.xlu0 %v488, 8
        %v899 = vpop.permute.xlu0 %898
        %900 = vrot.lane.b32.xlu0 %v489, 8
        %v901 = vpop.permute.xlu0 %900
        %902 = vrot.lane.b32.xlu0 %v490, 8
        %v903 = vpop.permute.xlu0 %902
        %904 = vrot.lane.b32.xlu0 %v491, 8
        %v905 = vpop.permute.xlu0 %904
        %906 = vrot.lane.b32.xlu0 %v492, 8
        %v907 = vpop.permute.xlu0 %906
        %908 = vrot.lane.b32.xlu0 %v493, 8
        %v909 = vpop.permute.xlu0 %908
        %910 = vrot.lane.b32.xlu0 %v494, 8
        %v911 = vpop.permute.xlu0 %910
        %976 = vrot.lane.b32.xlu0 %v495, 12
        %v977 = vpop.permute.xlu0 %976
        %978 = vrot.lane.b32.xlu0 %v496, 12
        %v979 = vpop.permute.xlu0 %978
        %980 = vrot.lane.b32.xlu0 %v497, 12
        %v981 = vpop.permute.xlu0 %980
        %982 = vrot.lane.b32.xlu0 %v498, 12
        %v983 = vpop.permute.xlu0 %982
        %984 = vrot.lane.b32.xlu0 %v499, 12
        %v985 = vpop.permute.xlu0 %984
        %986 = vrot.lane.b32.xlu0 %v500, 12
        %v987 = vpop.permute.xlu0 %986
        %988 = vrot.lane.b32.xlu0 %v501, 12
        %v989 = vpop.permute.xlu0 %988
        %990 = vrot.lane.b32.xlu0 %v502, 12
        %v991 = vpop.permute.xlu0 %990
        %992 = vrot.lane.b32.xlu0 %v503, 12
        %v993 = vpop.permute.xlu0 %992
        %994 = vrot.lane.b32.xlu0 %v504, 12
        %v995 = vpop.permute.xlu0 %994
        %996 = vrot.lane.b32.xlu0 %v505, 12
        %v997 = vpop.permute.xlu0 %996
        %998 = vrot.lane.b32.xlu0 %v506, 12
        %v999 = vpop.permute.xlu0 %998
        %1000 = vrot.lane.b32.xlu0 %v507, 12
        %v1001 = vpop.permute.xlu0 %1000
        %1002 = vrot.lane.b32.xlu0 %v508, 12
        %v1003 = vpop.permute.xlu0 %1002
        %1004 = vrot.lane.b32.xlu0 %v509, 12
        %v1005 = vpop.permute.xlu0 %1004
        %1006 = vrot.lane.b32.xlu0 %v510, 12
        %v1007 = vpop.permute.xlu0 %1006
        %1008 = vrot.lane.b32.xlu0 %v511, 12
        %v1009 = vpop.permute.xlu0 %1008
        %1010 = vrot.lane.b32.xlu0 %v512, 12
        %v1011 = vpop.permute.xlu0 %1010
        %1012 = vrot.lane.b32.xlu0 %v513, 12
        %v1013 = vpop.permute.xlu0 %1012
        %1014 = vrot.lane.b32.xlu0 %v514, 12
        %v1015 = vpop.permute.xlu0 %1014
        %1016 = vrot.lane.b32.xlu0 %v515, 12
        %v1017 = vpop.permute.xlu0 %1016
        %1018 = vrot.lane.b32.xlu0 %v516, 12
        %v1019 = vpop.permute.xlu0 %1018
        %1020 = vrot.lane.b32.xlu0 %v517, 12
        %v1021 = vpop.permute.xlu0 %1020
        %1022 = vrot.lane.b32.xlu0 %v518, 12
        %v1023 = vpop.permute.xlu0 %1022
        %1024 = vrot.lane.b32.xlu0 %v519, 12
        %v1025 = vpop.permute.xlu0 %1024
        %1026 = vrot.lane.b32.xlu0 %v520, 12
        %v1027 = vpop.permute.xlu0 %1026
        %1028 = vrot.lane.b32.xlu0 %v521, 12
        %v1029 = vpop.permute.xlu0 %1028
        %1030 = vrot.lane.b32.xlu0 %v522, 12
        %v1031 = vpop.permute.xlu0 %1030
        %1032 = vrot.lane.b32.xlu0 %v523, 12
        %v1033 = vpop.permute.xlu0 %1032
        %1034 = vrot.lane.b32.xlu0 %v524, 12
        %v1035 = vpop.permute.xlu0 %1034
        %1036 = vrot.lane.b32.xlu0 %v525, 12
        %v1037 = vpop.permute.xlu0 %1036
        %1038 = vrot.lane.b32.xlu0 %v526, 12
        %v1039 = vpop.permute.xlu0 %1038
        %1104 = vrot.lane.b32.xlu0 %v527, 16
        %v1105 = vpop.permute.xlu0 %1104
        %1106 = vrot.lane.b32.xlu0 %v528, 16
        %v1107 = vpop.permute.xlu0 %1106
        %1108 = vrot.lane.b32.xlu0 %v529, 16
        %v1109 = vpop.permute.xlu0 %1108
        %1110 = vrot.lane.b32.xlu0 %v530, 16
        %v1111 = vpop.permute.xlu0 %1110
        %1112 = vrot.lane.b32.xlu0 %v531, 16
        %v1113 = vpop.permute.xlu0 %1112
        %1114 = vrot.lane.b32.xlu0 %v532, 16
        %v1115 = vpop.permute.xlu0 %1114
        %1116 = vrot.lane.b32.xlu0 %v533, 16
        %v1117 = vpop.permute.xlu0 %1116
        %1118 = vrot.lane.b32.xlu0 %v534, 16
        %v1119 = vpop.permute.xlu0 %1118
        %1120 = vrot.lane.b32.xlu0 %v535, 16
        %v1121 = vpop.permute.xlu0 %1120
        %1122 = vrot.lane.b32.xlu0 %v536, 16
        %v1123 = vpop.permute.xlu0 %1122
        %1124 = vrot.lane.b32.xlu0 %v537, 16
        %v1125 = vpop.permute.xlu0 %1124
        %1126 = vrot.lane.b32.xlu0 %v538, 16
        %v1127 = vpop.permute.xlu0 %1126
        %1128 = vrot.lane.b32.xlu0 %v539, 16
        %v1129 = vpop.permute.xlu0 %1128
        %1130 = vrot.lane.b32.xlu0 %v540, 16
        %v1131 = vpop.permute.xlu0 %1130
        %1132 = vrot.lane.b32.xlu0 %v541, 16
        %v1133 = vpop.permute.xlu0 %1132
        %1134 = vrot.lane.b32.xlu0 %v542, 16
        %v1135 = vpop.permute.xlu0 %1134
        %1136 = vrot.lane.b32.xlu0 %v543, 16
        %v1137 = vpop.permute.xlu0 %1136
        %1138 = vrot.lane.b32.xlu0 %v544, 16
        %v1139 = vpop.permute.xlu0 %1138
        %1140 = vrot.lane.b32.xlu0 %v545, 16
        %v1141 = vpop.permute.xlu0 %1140
        %1142 = vrot.lane.b32.xlu0 %v546, 16
        %v1143 = vpop.permute.xlu0 %1142
        %1144 = vrot.lane.b32.xlu0 %v547, 16
        %v1145 = vpop.permute.xlu0 %1144
        %1146 = vrot.lane.b32.xlu0 %v548, 16
        %v1147 = vpop.permute.xlu0 %1146
        %1148 = vrot.lane.b32.xlu0 %v549, 16
        %v1149 = vpop.permute.xlu0 %1148
        %1150 = vrot.lane.b32.xlu0 %v550, 16
        %v1151 = vpop.permute.xlu0 %1150
        %1152 = vrot.lane.b32.xlu0 %v551, 16
        %v1153 = vpop.permute.xlu0 %1152
        %1154 = vrot.lane.b32.xlu0 %v552, 16
        %v1155 = vpop.permute.xlu0 %1154
        %1156 = vrot.lane.b32.xlu0 %v553, 16
        %v1157 = vpop.permute.xlu0 %1156
        %1158 = vrot.lane.b32.xlu0 %v554, 16
        %v1159 = vpop.permute.xlu0 %1158
        %1160 = vrot.lane.b32.xlu0 %v555, 16
        %v1161 = vpop.permute.xlu0 %1160
        %1162 = vrot.lane.b32.xlu0 %v556, 16
        %v1163 = vpop.permute.xlu0 %1162
        %1164 = vrot.lane.b32.xlu0 %v557, 16
        %v1165 = vpop.permute.xlu0 %1164
        %1166 = vrot.lane.b32.xlu0 %v558, 16
        %v1167 = vpop.permute.xlu0 %1166
        %1232 = vrot.lane.b32.xlu0 %v559, 20
        %v1233 = vpop.permute.xlu0 %1232
        %1234 = vrot.lane.b32.xlu0 %v560, 20
        %v1235 = vpop.permute.xlu0 %1234
        %1236 = vrot.lane.b32.xlu0 %v561, 20
        %v1237 = vpop.permute.xlu0 %1236
        %1238 = vrot.lane.b32.xlu0 %v562, 20
        %v1239 = vpop.permute.xlu0 %1238
        %1240 = vrot.lane.b32.xlu0 %v563, 20
        %v1241 = vpop.permute.xlu0 %1240
        %1242 = vrot.lane.b32.xlu0 %v564, 20
        %v1243 = vpop.permute.xlu0 %1242
        %1244 = vrot.lane.b32.xlu0 %v565, 20
        %v1245 = vpop.permute.xlu0 %1244
        %1246 = vrot.lane.b32.xlu0 %v566, 20
        %v1247 = vpop.permute.xlu0 %1246
        %1248 = vrot.lane.b32.xlu0 %v567, 20
        %v1249 = vpop.permute.xlu0 %1248
        %1250 = vrot.lane.b32.xlu0 %v568, 20
        %v1251 = vpop.permute.xlu0 %1250
        %1252 = vrot.lane.b32.xlu0 %v569, 20
        %v1253 = vpop.permute.xlu0 %1252
        %1254 = vrot.lane.b32.xlu0 %v570, 20
        %v1255 = vpop.permute.xlu0 %1254
        %1256 = vrot.lane.b32.xlu0 %v571, 20
        %v1257 = vpop.permute.xlu0 %1256
        %1258 = vrot.lane.b32.xlu0 %v572, 20
        %v1259 = vpop.permute.xlu0 %1258
        %1260 = vrot.lane.b32.xlu0 %v573, 20
        %v1261 = vpop.permute.xlu0 %1260
        %1262 = vrot.lane.b32.xlu0 %v574, 20
        %v1263 = vpop.permute.xlu0 %1262
        %1264 = vrot.lane.b32.xlu0 %v575, 20
        %v1265 = vpop.permute.xlu0 %1264
        %1266 = vrot.lane.b32.xlu0 %v576, 20
        %v1267 = vpop.permute.xlu0 %1266
        %1268 = vrot.lane.b32.xlu0 %v577, 20
        %v1269 = vpop.permute.xlu0 %1268
        %1270 = vrot.lane.b32.xlu0 %v578, 20
        %v1271 = vpop.permute.xlu0 %1270
        %1272 = vrot.lane.b32.xlu0 %v579, 20
        %v1273 = vpop.permute.xlu0 %1272
        %1274 = vrot.lane.b32.xlu0 %v580, 20
        %v1275 = vpop.permute.xlu0 %1274
        %1276 = vrot.lane.b32.xlu0 %v581, 20
        %v1277 = vpop.permute.xlu0 %1276
        %1278 = vrot.lane.b32.xlu0 %v582, 20
        %v1279 = vpop.permute.xlu0 %1278
        %1280 = vrot.lane.b32.xlu0 %v583, 20
        %v1281 = vpop.permute.xlu0 %1280
        %1282 = vrot.lane.b32.xlu0 %v584, 20
        %v1283 = vpop.permute.xlu0 %1282
        %1284 = vrot.lane.b32.xlu0 %v585, 20
        %v1285 = vpop.permute.xlu0 %1284
        %1286 = vrot.lane.b32.xlu0 %v586, 20
        %v1287 = vpop.permute.xlu0 %1286
        %1288 = vrot.lane.b32.xlu0 %v587, 20
        %v1289 = vpop.permute.xlu0 %1288
        %1290 = vrot.lane.b32.xlu0 %v588, 20
        %v1291 = vpop.permute.xlu0 %1290
        %1292 = vrot.lane.b32.xlu0 %v589, 20
        %v1293 = vpop.permute.xlu0 %1292
        %1294 = vrot.lane.b32.xlu0 %v590, 20
        %v1295 = vpop.permute.xlu0 %1294
        %1360 = vrot.lane.b32.xlu0 %v592, 24
        %v1361 = vpop.permute.xlu0 %1360
        %1362 = vrot.lane.b32.xlu0 %v593, 24
        %v1363 = vpop.permute.xlu0 %1362
        %1364 = vrot.lane.b32.xlu0 %v594, 24
        %v1365 = vpop.permute.xlu0 %1364
        %1366 = vrot.lane.b32.xlu0 %v595, 24
        %v1367 = vpop.permute.xlu0 %1366
        %1368 = vrot.lane.b32.xlu0 %v596, 24
        %v1369 = vpop.permute.xlu0 %1368
        %1370 = vrot.lane.b32.xlu0 %v597, 24
        %v1371 = vpop.permute.xlu0 %1370
        %1372 = vrot.lane.b32.xlu0 %v598, 24
        %v1373 = vpop.permute.xlu0 %1372
        %1374 = vrot.lane.b32.xlu0 %v599, 24
        %v1375 = vpop.permute.xlu0 %1374
        %1376 = vrot.lane.b32.xlu0 %v600, 24
        %v1377 = vpop.permute.xlu0 %1376
        %1378 = vrot.lane.b32.xlu0 %v601, 24
        %v1379 = vpop.permute.xlu0 %1378
        %1380 = vrot.lane.b32.xlu0 %v602, 24
        %v1381 = vpop.permute.xlu0 %1380
        %1382 = vrot.lane.b32.xlu0 %v603, 24
        %v1383 = vpop.permute.xlu0 %1382
        %1384 = vrot.lane.b32.xlu0 %v604, 24
        %v1385 = vpop.permute.xlu0 %1384
        %1386 = vrot.lane.b32.xlu0 %v605, 24
        %v1387 = vpop.permute.xlu0 %1386
        %1388 = vrot.lane.b32.xlu0 %v606, 24
        %v1389 = vpop.permute.xlu0 %1388
        %1390 = vrot.lane.b32.xlu0 %v607, 24
        %v1391 = vpop.permute.xlu0 %1390
        %1392 = vrot.lane.b32.xlu0 %v608, 24
        %v1393 = vpop.permute.xlu0 %1392
        %1394 = vrot.lane.b32.xlu0 %v609, 24
        %v1395 = vpop.permute.xlu0 %1394
        %1396 = vrot.lane.b32.xlu0 %v610, 24
        %v1397 = vpop.permute.xlu0 %1396
        %1398 = vrot.lane.b32.xlu0 %v611, 24
        %v1399 = vpop.permute.xlu0 %1398
        %1400 = vrot.lane.b32.xlu0 %v612, 24
        %v1401 = vpop.permute.xlu0 %1400
        %1402 = vrot.lane.b32.xlu0 %v613, 24
        %v1403 = vpop.permute.xlu0 %1402
        %1404 = vrot.lane.b32.xlu0 %v614, 24
        %v1405 = vpop.permute.xlu0 %1404
        %1406 = vrot.lane.b32.xlu0 %v615, 24
        %v1407 = vpop.permute.xlu0 %1406
        %1408 = vrot.lane.b32.xlu0 %v616, 24
        %v1409 = vpop.permute.xlu0 %1408
        %1410 = vrot.lane.b32.xlu0 %v617, 24
        %v1411 = vpop.permute.xlu0 %1410
        %1412 = vrot.lane.b32.xlu0 %v618, 24
        %v1413 = vpop.permute.xlu0 %1412
        %1414 = vrot.lane.b32.xlu0 %v619, 24
        %v1415 = vpop.permute.xlu0 %1414
        %1416 = vrot.lane.b32.xlu0 %v620, 24
        %v1417 = vpop.permute.xlu0 %1416
        %1418 = vrot.lane.b32.xlu0 %v621, 24
        %v1419 = vpop.permute.xlu0 %1418
        %1420 = vrot.lane.b32.xlu0 %v622, 24
        %v1421 = vpop.permute.xlu0 %1420
        %1422 = vrot.lane.b32.xlu0 %v623, 24
        %v1423 = vpop.permute.xlu0 %1422
        %1488 = vrot.lane.b32.xlu0 %v624, 28
        %v1489 = vpop.permute.xlu0 %1488
        %1490 = vrot.lane.b32.xlu0 %v625, 28
        %v1491 = vpop.permute.xlu0 %1490
        %1492 = vrot.lane.b32.xlu0 %v626, 28
        %v1493 = vpop.permute.xlu0 %1492
        %1494 = vrot.lane.b32.xlu0 %v627, 28
        %v1495 = vpop.permute.xlu0 %1494
        %1496 = vrot.lane.b32.xlu0 %v628, 28
        %v1497 = vpop.permute.xlu0 %1496
        %1498 = vrot.lane.b32.xlu0 %v629, 28
        %v1499 = vpop.permute.xlu0 %1498
        %1500 = vrot.lane.b32.xlu0 %v630, 28
        %v1501 = vpop.permute.xlu0 %1500
        %1502 = vrot.lane.b32.xlu0 %v631, 28
        %v1503 = vpop.permute.xlu0 %1502
        %1504 = vrot.lane.b32.xlu0 %v632, 28
        %v1505 = vpop.permute.xlu0 %1504
        %1506 = vrot.lane.b32.xlu0 %v633, 28
        %v1507 = vpop.permute.xlu0 %1506
        %1508 = vrot.lane.b32.xlu0 %v634, 28
        %v1509 = vpop.permute.xlu0 %1508
        %1510 = vrot.lane.b32.xlu0 %v635, 28
        %v1511 = vpop.permute.xlu0 %1510
        %1512 = vrot.lane.b32.xlu0 %v636, 28
        %v1513 = vpop.permute.xlu0 %1512
        %1514 = vrot.lane.b32.xlu0 %v637, 28
        %v1515 = vpop.permute.xlu0 %1514
        %1516 = vrot.lane.b32.xlu0 %v638, 28
        %v1517 = vpop.permute.xlu0 %1516
        %1518 = vrot.lane.b32.xlu0 %v639, 28
        %v1519 = vpop.permute.xlu0 %1518
        %1520 = vrot.lane.b32.xlu0 %v640, 28
        %v1521 = vpop.permute.xlu0 %1520
        %1522 = vrot.lane.b32.xlu0 %v641, 28
        %v1523 = vpop.permute.xlu0 %1522
        %1524 = vrot.lane.b32.xlu0 %v642, 28
        %v1525 = vpop.permute.xlu0 %1524
        %1526 = vrot.lane.b32.xlu0 %v643, 28
        %v1527 = vpop.permute.xlu0 %1526
        %1528 = vrot.lane.b32.xlu0 %v644, 28
        %v1529 = vpop.permute.xlu0 %1528
        %1530 = vrot.lane.b32.xlu0 %v645, 28
        %v1531 = vpop.permute.xlu0 %1530
        %1532 = vrot.lane.b32.xlu0 %v646, 28
        %v1533 = vpop.permute.xlu0 %1532
        %1534 = vrot.lane.b32.xlu0 %v647, 28
        %v1535 = vpop.permute.xlu0 %1534
        %1536 = vrot.lane.b32.xlu0 %v648, 28
        %v1537 = vpop.permute.xlu0 %1536
        %1538 = vrot.lane.b32.xlu0 %v649, 28
        %v1539 = vpop.permute.xlu0 %1538
        %1540 = vrot.lane.b32.xlu0 %v650, 28
        %v1541 = vpop.permute.xlu0 %1540
        %1542 = vrot.lane.b32.xlu0 %v651, 28
        %v1543 = vpop.permute.xlu0 %1542
        %1544 = vrot.lane.b32.xlu0 %v652, 28
        %v1545 = vpop.permute.xlu0 %1544
        %1546 = vrot.lane.b32.xlu0 %v653, 28
        %v1547 = vpop.permute.xlu0 %1546
        %1548 = vrot.lane.b32.xlu0 %v654, 28
        %v1549 = vpop.permute.xlu0 %1548
        %1550 = vrot.lane.b32.xlu0 %v655, 28
        %v1551 = vpop.permute.xlu0 %1550
        %1616 = vrot.lane.b32.xlu0 %v656, 32
        %v1617 = vpop.permute.xlu0 %1616
        %1618 = vrot.lane.b32.xlu0 %v657, 32
        %v1619 = vpop.permute.xlu0 %1618
        %1620 = vrot.lane.b32.xlu0 %v658, 32
        %v1621 = vpop.permute.xlu0 %1620
        %1622 = vrot.lane.b32.xlu0 %v659, 32
        %v1623 = vpop.permute.xlu0 %1622
        %1624 = vrot.lane.b32.xlu0 %v660, 32
        %v1625 = vpop.permute.xlu0 %1624
        %1626 = vrot.lane.b32.xlu0 %v661, 32
        %v1627 = vpop.permute.xlu0 %1626
        %1628 = vrot.lane.b32.xlu0 %v662, 32
        %v1629 = vpop.permute.xlu0 %1628
        %1630 = vrot.lane.b32.xlu0 %v663, 32
        %v1631 = vpop.permute.xlu0 %1630
        %1632 = vrot.lane.b32.xlu0 %v664, 32
        %v1633 = vpop.permute.xlu0 %1632
        %1634 = vrot.lane.b32.xlu0 %v665, 32
        %v1635 = vpop.permute.xlu0 %1634
        %1636 = vrot.lane.b32.xlu0 %v666, 32
        %v1637 = vpop.permute.xlu0 %1636
        %1638 = vrot.lane.b32.xlu0 %v667, 32
        %v1639 = vpop.permute.xlu0 %1638
        %1640 = vrot.lane.b32.xlu0 %v668, 32
        %v1641 = vpop.permute.xlu0 %1640
        %1642 = vrot.lane.b32.xlu0 %v669, 32
        %v1643 = vpop.permute.xlu0 %1642
        %1644 = vrot.lane.b32.xlu0 %v670, 32
        %v1645 = vpop.permute.xlu0 %1644
        %1646 = vrot.lane.b32.xlu0 %v671, 32
        %v1647 = vpop.permute.xlu0 %1646
        %1648 = vrot.lane.b32.xlu0 %v672, 32
        %v1649 = vpop.permute.xlu0 %1648
        %1650 = vrot.lane.b32.xlu0 %v673, 32
        %v1651 = vpop.permute.xlu0 %1650
        %1652 = vrot.lane.b32.xlu0 %v674, 32
        %v1653 = vpop.permute.xlu0 %1652
        %1654 = vrot.lane.b32.xlu0 %v675, 32
        %v1655 = vpop.permute.xlu0 %1654
        %1656 = vrot.lane.b32.xlu0 %v676, 32
        %v1657 = vpop.permute.xlu0 %1656
        %1658 = vrot.lane.b32.xlu0 %v677, 32
        %v1659 = vpop.permute.xlu0 %1658
        %1660 = vrot.lane.b32.xlu0 %v678, 32
        %v1661 = vpop.permute.xlu0 %1660
        %1662 = vrot.lane.b32.xlu0 %v679, 32
        %v1663 = vpop.permute.xlu0 %1662
        %1664 = vrot.lane.b32.xlu0 %v680, 32
        %v1665 = vpop.permute.xlu0 %1664
        %1666 = vrot.lane.b32.xlu0 %v681, 32
        %v1667 = vpop.permute.xlu0 %1666
        %1668 = vrot.lane.b32.xlu0 %v682, 32
        %v1669 = vpop.permute.xlu0 %1668
        %1670 = vrot.lane.b32.xlu0 %v683, 32
        %v1671 = vpop.permute.xlu0 %1670
        %1672 = vrot.lane.b32.xlu0 %v684, 32
        %v1673 = vpop.permute.xlu0 %1672
        %1674 = vrot.lane.b32.xlu0 %v685, 32
        %v1675 = vpop.permute.xlu0 %1674
        %1676 = vrot.lane.b32.xlu0 %v686, 32
        %v1677 = vpop.permute.xlu0 %1676
        %1678 = vrot.lane.b32.xlu0 %v687, 32
        %v1679 = vpop.permute.xlu0 %1678
        %v1712 = vsel %vm310, %v399, %v721
        %v1713 = vsel %vm310, %v400, %v723
        %v1714 = vsel %vm310, %v401, %v725
        %v1715 = vsel %vm310, %v402, %v727
        %v1716 = vsel %vm310, %v403, %v729
        %v1717 = vsel %vm310, %v404, %v731
        %v1718 = vsel %vm310, %v405, %v733
        %v1719 = vsel %vm310, %v406, %v735
        %v1720 = vsel %vm310, %v407, %v737
        %v1721 = vsel %vm310, %v408, %v739
        %v1722 = vsel %vm310, %v409, %v741
        %v1723 = vsel %vm310, %v410, %v743
        %v1724 = vsel %vm310, %v411, %v745
        %v1725 = vsel %vm310, %v412, %v747
        %v1726 = vsel %vm310, %v413, %v749
        %v1727 = vsel %vm310, %v414, %v751
        %v1728 = vsel %vm310, %v415, %v753
        %v1729 = vsel %vm310, %v416, %v755
        %v1730 = vsel %vm310, %v417, %v757
        %v1731 = vsel %vm310, %v418, %v759
        %v1732 = vsel %vm310, %v419, %v761
        %v1733 = vsel %vm310, %v420, %v763
        %v1734 = vsel %vm310, %v421, %v765
        %v1735 = vsel %vm310, %v422, %v767
        %v1736 = vsel %vm310, %v423, %v769
        %v1737 = vsel %vm310, %v424, %v771
        %v1738 = vsel %vm310, %v425, %v773
        %v1739 = vsel %vm310, %v426, %v775
        %v1740 = vsel %vm310, %v427, %v777
        %v1741 = vsel %vm310, %v428, %v779
        %v1742 = vsel %vm310, %v429, %v781
        %v1743 = vsel %vm310, %v430, %v783
        %vm1744 = vcmask 64512
        %v1745 = vsel %vm1744, %v1712, %v849
        %v1746 = vsel %vm1744, %v1713, %v851
        %v1747 = vsel %vm1744, %v1714, %v853
        %v1748 = vsel %vm1744, %v1715, %v855
        %v1749 = vsel %vm1744, %v1716, %v857
        %v1750 = vsel %vm1744, %v1717, %v859
        %v1751 = vsel %vm1744, %v1718, %v861
        %v1752 = vsel %vm1744, %v1719, %v863
        %v1753 = vsel %vm1744, %v1720, %v865
        %v1754 = vsel %vm1744, %v1721, %v867
        %v1755 = vsel %vm1744, %v1722, %v869
        %v1756 = vsel %vm1744, %v1723, %v871
        %v1757 = vsel %vm1744, %v1724, %v873
        %v1758 = vsel %vm1744, %v1725, %v875
        %v1759 = vsel %vm1744, %v1726, %v877
        %v1760 = vsel %vm1744, %v1727, %v879
        %v1761 = vsel %vm1744, %v1728, %v881
        %v1762 = vsel %vm1744, %v1729, %v883
        %v1763 = vsel %vm1744, %v1730, %v885
        %v1764 = vsel %vm1744, %v1731, %v887
        %v1765 = vsel %vm1744, %v1732, %v889
        %v1766 = vsel %vm1744, %v1733, %v891
        %v1767 = vsel %vm1744, %v1734, %v893
        %v1768 = vsel %vm1744, %v1735, %v895
        %v1769 = vsel %vm1744, %v1736, %v897
        %v1770 = vsel %vm1744, %v1737, %v899
        %v1771 = vsel %vm1744, %v1738, %v901
        %v1772 = vsel %vm1744, %v1739, %v903
        %v1773 = vsel %vm1744, %v1740, %v905
        %v1774 = vsel %vm1744, %v1741, %v907
        %v1775 = vsel %vm1744, %v1742, %v909
        %v1776 = vsel %vm1744, %v1743, %v911
        %vm1777 = vcmask 97280
        %v1778 = vsel %vm1777, %v1745, %v977
        %v1779 = vsel %vm1777, %v1746, %v979
        %v1780 = vsel %vm1777, %v1747, %v981
        %v1781 = vsel %vm1777, %v1748, %v983
        %v1782 = vsel %vm1777, %v1749, %v985
        %v1783 = vsel %vm1777, %v1750, %v987
        %v1784 = vsel %vm1777, %v1751, %v989
        %v1785 = vsel %vm1777, %v1752, %v991
        %v1786 = vsel %vm1777, %v1753, %v993
        %v1787 = vsel %vm1777, %v1754, %v995
        %v1788 = vsel %vm1777, %v1755, %v997
        %v1789 = vsel %vm1777, %v1756, %v999
        %v1790 = vsel %vm1777, %v1757, %v1001
        %v1791 = vsel %vm1777, %v1758, %v1003
        %v1792 = vsel %vm1777, %v1759, %v1005
        %v1793 = vsel %vm1777, %v1760, %v1007
        %v1794 = vsel %vm1777, %v1761, %v1009
        %v1795 = vsel %vm1777, %v1762, %v1011
        %v1796 = vsel %vm1777, %v1763, %v1013
        %v1797 = vsel %vm1777, %v1764, %v1015
        %v1798 = vsel %vm1777, %v1765, %v1017
        %v1799 = vsel %vm1777, %v1766, %v1019
        %v1800 = vsel %vm1777, %v1767, %v1021
        %v1801 = vsel %vm1777, %v1768, %v1023
        %v1802 = vsel %vm1777, %v1769, %v1025
        %v1803 = vsel %vm1777, %v1770, %v1027
        %v1804 = vsel %vm1777, %v1771, %v1029
        %v1805 = vsel %vm1777, %v1772, %v1031
        %v1806 = vsel %vm1777, %v1773, %v1033
        %v1807 = vsel %vm1777, %v1774, %v1035
        %v1808 = vsel %vm1777, %v1775, %v1037
        %v1809 = vsel %vm1777, %v1776, %v1039
        %vm1810 = vcmask 130048
        %v1811 = vsel %vm1810, %v1778, %v1105
        %v1812 = vsel %vm1810, %v1779, %v1107
        %v1813 = vsel %vm1810, %v1780, %v1109
        %v1814 = vsel %vm1810, %v1781, %v1111
        %v1815 = vsel %vm1810, %v1782, %v1113
        %v1816 = vsel %vm1810, %v1783, %v1115
        %v1817 = vsel %vm1810, %v1784, %v1117
        %v1818 = vsel %vm1810, %v1785, %v1119
        %v1819 = vsel %vm1810, %v1786, %v1121
        %v1820 = vsel %vm1810, %v1787, %v1123
        %v1821 = vsel %vm1810, %v1788, %v1125
        %v1822 = vsel %vm1810, %v1789, %v1127
        %v1823 = vsel %vm1810, %v1790, %v1129
        %v1824 = vsel %vm1810, %v1791, %v1131
        %v1825 = vsel %vm1810, %v1792, %v1133
        %v1826 = vsel %vm1810, %v1793, %v1135
        %v1827 = vsel %vm1810, %v1794, %v1137
        %v1828 = vsel %vm1810, %v1795, %v1139
        %v1829 = vsel %vm1810, %v1796, %v1141
        %v1830 = vsel %vm1810, %v1797, %v1143
        %v1831 = vsel %vm1810, %v1798, %v1145
        %v1832 = vsel %vm1810, %v1799, %v1147
        %v1833 = vsel %vm1810, %v1800, %v1149
        %v1834 = vsel %vm1810, %v1801, %v1151
        %v1835 = vsel %vm1810, %v1802, %v1153
        %v1836 = vsel %vm1810, %v1803, %v1155
        %v1837 = vsel %vm1810, %v1804, %v1157
        %v1838 = vsel %vm1810, %v1805, %v1159
        %v1839 = vsel %vm1810, %v1806, %v1161
        %v1840 = vsel %vm1810, %v1807, %v1163
        %v1841 = vsel %vm1810, %v1808, %v1165
        %v1842 = vsel %vm1810, %v1809, %v1167
        %vm1843 = vcmask 162816
        %v1844 = vsel %vm1843, %v1811, %v1233
        %v1845 = vsel %vm1843, %v1812, %v1235
        %v1846 = vsel %vm1843, %v1813, %v1237
        %v1847 = vsel %vm1843, %v1814, %v1239
        %v1848 = vsel %vm1843, %v1815, %v1241
        %v1849 = vsel %vm1843, %v1816, %v1243
        %v1850 = vsel %vm1843, %v1817, %v1245
        %v1851 = vsel %vm1843, %v1818, %v1247
        %v1852 = vsel %vm1843, %v1819, %v1249
        %v1853 = vsel %vm1843, %v1820, %v1251
        %v1854 = vsel %vm1843, %v1821, %v1253
        %v1855 = vsel %vm1843, %v1822, %v1255
        %v1856 = vsel %vm1843, %v1823, %v1257
        %v1857 = vsel %vm1843, %v1824, %v1259
        %v1858 = vsel %vm1843, %v1825, %v1261
        %v1859 = vsel %vm1843, %v1826, %v1263
        %v1860 = vsel %vm1843, %v1827, %v1265
        %v1861 = vsel %vm1843, %v1828, %v1267
        %v1862 = vsel %vm1843, %v1829, %v1269
        %v1863 = vsel %vm1843, %v1830, %v1271
        %v1864 = vsel %vm1843, %v1831, %v1273
        %v1865 = vsel %vm1843, %v1832, %v1275
        %v1866 = vsel %vm1843, %v1833, %v1277
        %v1867 = vsel %vm1843, %v1834, %v1279
        %v1868 = vsel %vm1843, %v1835, %v1281
        %v1869 = vsel %vm1843, %v1836, %v1283
        %v1870 = vsel %vm1843, %v1837, %v1285
        %v1871 = vsel %vm1843, %v1838, %v1287
        %v1872 = vsel %vm1843, %v1839, %v1289
        %v1873 = vsel %vm1843, %v1840, %v1291
        %v1874 = vsel %vm1843, %v1841, %v1293
        %v1875 = vsel %vm1843, %v1842, %v1295
        %vm1876 = vcmask 195584
        %v1877 = vsel %vm1876, %v1844, %v1361
        %v1878 = vsel %vm1876, %v1845, %v1363
        %v1879 = vsel %vm1876, %v1846, %v1365
        %v1880 = vsel %vm1876, %v1847, %v1367
        %v1881 = vsel %vm1876, %v1848, %v1369
        %v1882 = vsel %vm1876, %v1849, %v1371
        %v1883 = vsel %vm1876, %v1850, %v1373
        %v1884 = vsel %vm1876, %v1851, %v1375
        %v1885 = vsel %vm1876, %v1852, %v1377
        %v1886 = vsel %vm1876, %v1853, %v1379
        %v1887 = vsel %vm1876, %v1854, %v1381
        %v1888 = vsel %vm1876, %v1855, %v1383
        %v1889 = vsel %vm1876, %v1856, %v1385
        %v1890 = vsel %vm1876, %v1857, %v1387
        %v1891 = vsel %vm1876, %v1858, %v1389
        %v1892 = vsel %vm1876, %v1859, %v1391
        %v1893 = vsel %vm1876, %v1860, %v1393
        %v1894 = vsel %vm1876, %v1861, %v1395
        %v1895 = vsel %vm1876, %v1862, %v1397
        %v1896 = vsel %vm1876, %v1863, %v1399
        %v1897 = vsel %vm1876, %v1864, %v1401
        %v1898 = vsel %vm1876, %v1865, %v1403
        %v1899 = vsel %vm1876, %v1866, %v1405
        %v1900 = vsel %vm1876, %v1867, %v1407
        %v1901 = vsel %vm1876, %v1868, %v1409
        %v1902 = vsel %vm1876, %v1869, %v1411
        %v1903 = vsel %vm1876, %v1870, %v1413
        %v1904 = vsel %vm1876, %v1871, %v1415
        %v1905 = vsel %vm1876, %v1872, %v1417
        %v1906 = vsel %vm1876, %v1873, %v1419
        %v1907 = vsel %vm1876, %v1874, %v1421
        %v1908 = vsel %vm1876, %v1875, %v1423
        %vm1909 = vcmask 228352
        %v1910 = vsel %vm1909, %v1877, %v1489
        %v1911 = vsel %vm1909, %v1878, %v1491
        %v1912 = vsel %vm1909, %v1879, %v1493
        %v1913 = vsel %vm1909, %v1880, %v1495
        %v1914 = vsel %vm1909, %v1881, %v1497
        %v1915 = vsel %vm1909, %v1882, %v1499
        %v1916 = vsel %vm1909, %v1883, %v1501
        %v1917 = vsel %vm1909, %v1884, %v1503
        %v1918 = vsel %vm1909, %v1885, %v1505
        %v1919 = vsel %vm1909, %v1886, %v1507
        %v1920 = vsel %vm1909, %v1887, %v1509
        %v1921 = vsel %vm1909, %v1888, %v1511
        %v1922 = vsel %vm1909, %v1889, %v1513
        %v1923 = vsel %vm1909, %v1890, %v1515
        %v1924 = vsel %vm1909, %v1891, %v1517
        %v1925 = vsel %vm1909, %v1892, %v1519
        %v1926 = vsel %vm1909, %v1893, %v1521
        %v1927 = vsel %vm1909, %v1894, %v1523
        %v1928 = vsel %vm1909, %v1895, %v1525
        %v1929 = vsel %vm1909, %v1896, %v1527
        %v1930 = vsel %vm1909, %v1897, %v1529
        %v1931 = vsel %vm1909, %v1898, %v1531
        %v1932 = vsel %vm1909, %v1899, %v1533
        %v1933 = vsel %vm1909, %v1900, %v1535
        %v1934 = vsel %vm1909, %v1901, %v1537
        %v1935 = vsel %vm1909, %v1902, %v1539
        %v1936 = vsel %vm1909, %v1903, %v1541
        %v1937 = vsel %vm1909, %v1904, %v1543
        %v1938 = vsel %vm1909, %v1905, %v1545
        %v1939 = vsel %vm1909, %v1906, %v1547
        %v1940 = vsel %vm1909, %v1907, %v1549
        %v1941 = vsel %vm1909, %v1908, %v1551
        %vm1942 = vcmask 261120
        %v1943 = vsel %vm1942, %v1910, %v1617
        %v1944 = vsel %vm1942, %v1911, %v1619
        %v1945 = vsel %vm1942, %v1912, %v1621
        %v1946 = vsel %vm1942, %v1913, %v1623
        %v1947 = vsel %vm1942, %v1914, %v1625
        %v1948 = vsel %vm1942, %v1915, %v1627
        %v1949 = vsel %vm1942, %v1916, %v1629
        %v1950 = vsel %vm1942, %v1917, %v1631
        %v1951 = vsel %vm1942, %v1918, %v1633
        %v1952 = vsel %vm1942, %v1919, %v1635
        %v1953 = vsel %vm1942, %v1920, %v1637
        %v1954 = vsel %vm1942, %v1921, %v1639
        %v1955 = vsel %vm1942, %v1922, %v1641
        %v1956 = vsel %vm1942, %v1923, %v1643
        %v1957 = vsel %vm1942, %v1924, %v1645
        %v1958 = vsel %vm1942, %v1925, %v1647
        %v1959 = vsel %vm1942, %v1926, %v1649
        %v1960 = vsel %vm1942, %v1927, %v1651
        %v1961 = vsel %vm1942, %v1928, %v1653
        %v1962 = vsel %vm1942, %v1929, %v1655
        %v1963 = vsel %vm1942, %v1930, %v1657
        %v1964 = vsel %vm1942, %v1931, %v1659
        %v1965 = vsel %vm1942, %v1932, %v1661
        %v1966 = vsel %vm1942, %v1933, %v1663
        %v1967 = vsel %vm1942, %v1934, %v1665
        %v1968 = vsel %vm1942, %v1935, %v1667
        %v1969 = vsel %vm1942, %v1936, %v1669
        %v1970 = vsel %vm1942, %v1937, %v1671
        %v1971 = vsel %vm1942, %v1938, %v1673
        %v1972 = vsel %vm1942, %v1939, %v1675
        %v1973 = vsel %vm1942, %v1940, %v1677
        %v1974 = vsel %vm1942, %v1941, %v1679
        %v1975 = vpack.c.bf16 %v1944, %v1943
        %v1976 = vpack.c.bf16 %v1946, %v1945
        %v1977 = vpack.c.bf16 %v1948, %v1947
        %v1978 = vpack.c.bf16 %v1950, %v1949
        %v1979 = vpack.c.bf16 %v1952, %v1951
        %v1980 = vpack.c.bf16 %v1954, %v1953
        %v1981 = vpack.c.bf16 %v1956, %v1955
        %v1982 = vpack.c.bf16 %v1958, %v1957
        %v1983 = vpack.c.bf16 %v1960, %v1959
        %v1984 = vpack.c.bf16 %v1962, %v1961
        %v1985 = vpack.c.bf16 %v1964, %v1963
        %v1986 = vpack.c.bf16 %v1966, %v1965
        %v1987 = vpack.c.bf16 %v1968, %v1967
        %v1988 = vpack.c.bf16 %v1970, %v1969
        %v1989 = vpack.c.bf16 %v1972, %v1971
        %v1990 = vpack.c.bf16 %v1974, %v1973
        %v1991 = vld [vmem:[%s1] sm:$0xf]
        %v1992 = vld [vmem:[%s1 + $0x4] sm:$0xf]
        %v1993 = vld [vmem:[%s1 + $0x8] sm:$0xf]
        %v1994 = vld [vmem:[%s1 + $0xc] sm:$0xf]
        %v1995 = vld [vmem:[%s1 + $0x10] sm:$0x3]
        %v2001 = vunpack.c.l.b16 %v1991
        %v2002 = vunpack.c.l.b16 %v1992
        %v2003 = vunpack.c.l.b16 %v1993
        %v2004 = vunpack.c.l.b16 %v1994
        %v2005 = vunpack.c.l.b16 %v1995
        %v2006 = vpack.c.b16 %v2002, %v2001
        %v2007 = vpack.c.b16 %v2004, %v2003
        %v2008 = vpack.c.b16 %v2005, %v2005
        %vm2011 = vcmask 293888
        %v2013 = vsel %vm2011, %v1975, 0
        %v2016 = vsel %vm2011, %v1976, 0
        %v2019 = vsel %vm2011, %v1977, 0
        %v2022 = vsel %vm2011, %v1978, 0
        %v2025 = vsel %vm2011, %v1979, 0
        %v2028 = vsel %vm2011, %v1980, 0
        %v2031 = vsel %vm2011, %v1981, 0
        %v2034 = vsel %vm2011, %v1982, 0
        %v2037 = vsel %vm2011, %v1983, 0
        %v2040 = vsel %vm2011, %v1984, 0
        %v2043 = vsel %vm2011, %v1985, 0
        %v2046 = vsel %vm2011, %v1986, 0
        %v2049 = vsel %vm2011, %v1987, 0
        %v2052 = vsel %vm2011, %v1988, 0
        %v2055 = vsel %vm2011, %v1989, 0
        %v2058 = vsel %vm2011, %v1990, 0
        %vm2060 = vcmask 1041408
        %v2062 = vsel %vm2060, %v2008, 0
        %2064 = vmatprep.subr.bf16.mxu0 0
        %2065 = vmatpush1.bf16.msra.mxu0 %v2006
        %2066 = vmatprep.subr.bf16.mxu0 0
        %2067 = vmatpush1.bf16.msra.mxu0 %v2007
        %2068 = vmatprep.subr.bf16.mxu0 0
        %2069 = vmatpush1.bf16.msra.mxu0 %v2062
        %2070 = vmatprep.subr.bf16.mxu0 0
        %2071 = vmatpush1.bf16.msra.mxu0 0
        %2072 = vmatprep.subr.bf16.mxu0 0
        %2073 = vmatpush1.bf16.msra.mxu0 0
        %2074 = vmatprep.subr.bf16.mxu0 0
        %2075 = vmatpush1.bf16.msra.mxu0 0
        %2076 = vmatprep.subr.bf16.mxu0 0
        %2077 = vmatpush1.bf16.msra.mxu0 0
        %2078 = vmatprep.subr.bf16.mxu0 0
        %2079 = vmatpush1.bf16.msra.mxu0 0
        %2080 = vmatprep.subr.bf16.mxu0 0
        %2081 = vmatpush1.bf16.msra.mxu0 0
        %2082 = vmatprep.subr.bf16.mxu0 0
        %2083 = vmatpush1.bf16.msra.mxu0 0
        %2084 = vmatprep.subr.bf16.mxu0 0
        %2085 = vmatpush1.bf16.msra.mxu0 0
        %2086 = vmatprep.subr.bf16.mxu0 0
        %2087 = vmatpush1.bf16.msra.mxu0 0
        %2088 = vmatprep.subr.bf16.mxu0 0
        %2089 = vmatpush1.bf16.msra.mxu0 0
        %2090 = vmatprep.subr.bf16.mxu0 0
        %2091 = vmatpush1.bf16.msra.mxu0 0
        %2092 = vmatprep.subr.bf16.mxu0 0
        %2093 = vmatpush1.bf16.msra.mxu0 0
        %2094 = vmatprep.subr.bf16.mxu0 0
        %2095 = vmatpush1.bf16.msra.mxu0 0
        %2096 = vmatprep.mubr.bf16.mxu0 0
        %2097 = vmatmul.mubr.bf16.gmra.mrb[0].mxu0 %v2013
        %v2098 = vpop.f32.mrb[0].mxu0
        %v2099 = vadd.f32 0.0, %v2098
        %v2100 = vpop.f32.mrb[0].mxu0
        %v2101 = vpop.f32.mrb[0].mxu0
        %v2102 = vadd.f32 0.0, %v2101
        %v2103 = vpop.f32.mrb[0].mxu0
        %2104 = vmatprep.mubr.bf16.mxu0 0
        %2105 = vmatmul.mubr.bf16.gmra.mrb[0].mxu0 %v2016
        %v2106 = vpop.f32.mrb[0].mxu0
        %v2107 = vadd.f32 0.0, %v2106
        %v2108 = vpop.f32.mrb[0].mxu0
        %v2109 = vpop.f32.mrb[0].mxu0
        %v2110 = vadd.f32 0.0, %v2109
        %v2111 = vpop.f32.mrb[0].mxu0
        %2112 = vmatprep.mubr.bf16.mxu0 0
        %2113 = vmatmul.mubr.bf16.gmra.mrb[0].mxu0 %v2019
        %v2114 = vpop.f32.mrb[0].mxu0
        %v2115 = vadd.f32 0.0, %v2114
        %v2116 = vpop.f32.mrb[0].mxu0
        %v2117 = vpop.f32.mrb[0].mxu0
        %v2118 = vadd.f32 0.0, %v2117
        %v2119 = vpop.f32.mrb[0].mxu0
        %2120 = vmatprep.mubr.bf16.mxu0 0
        %2121 = vmatmul.mubr.bf16.gmra.mrb[0].mxu0 %v2022
        %v2122 = vpop.f32.mrb[0].mxu0
        %v2123 = vadd.f32 0.0, %v2122
        %v2124 = vpop.f32.mrb[0].mxu0
        %v2125 = vpop.f32.mrb[0].mxu0
        %v2126 = vadd.f32 0.0, %v2125
        %v2127 = vpop.f32.mrb[0].mxu0
        %2128 = vmatprep.mubr.bf16.mxu0 0
        %2129 = vmatmul.mubr.bf16.gmra.mrb[0].mxu0 %v2025
        %v2130 = vpop.f32.mrb[0].mxu0
        %v2131 = vadd.f32 0.0, %v2130
        %v2132 = vpop.f32.mrb[0].mxu0
        %v2133 = vpop.f32.mrb[0].mxu0
        %v2134 = vadd.f32 0.0, %v2133
        %v2135 = vpop.f32.mrb[0].mxu0
        %2136 = vmatprep.mubr.bf16.mxu0 0
        %2137 = vmatmul.mubr.bf16.gmra.mrb[0].mxu0 %v2028
        %v2138 = vpop.f32.mrb[0].mxu0
        %v2139 = vadd.f32 0.0, %v2138
        %v2140 = vpop.f32.mrb[0].mxu0
        %v2141 = vpop.f32.mrb[0].mxu0
        %v2142 = vadd.f32 0.0, %v2141
        %v2143 = vpop.f32.mrb[0].mxu0
        %2144 = vmatprep.mubr.bf16.mxu0 0
        %2145 = vmatmul.mubr.bf16.gmra.mrb[0].mxu0 %v2031
        %v2146 = vpop.f32.mrb[0].mxu0
        %v2147 = vadd.f32 0.0, %v2146
        %v2148 = vpop.f32.mrb[0].mxu0
        %v2149 = vpop.f32.mrb[0].mxu0
        %v2150 = vadd.f32 0.0, %v2149
        %v2151 = vpop.f32.mrb[0].mxu0
        %2152 = vmatprep.mubr.bf16.mxu0 0
        %2153 = vmatmul.mubr.bf16.gmra.mrb[0].mxu0 %v2034
        %v2154 = vpop.f32.mrb[0].mxu0
        %v2155 = vadd.f32 0.0, %v2154
        %v2156 = vpop.f32.mrb[0].mxu0
        %v2157 = vpop.f32.mrb[0].mxu0
        %v2158 = vadd.f32 0.0, %v2157
        %v2159 = vpop.f32.mrb[0].mxu0
        %2160 = vmatprep.mubr.bf16.mxu0 0
        %2161 = vmatmul.mubr.bf16.gmra.mrb[0].mxu0 %v2037
        %v2162 = vpop.f32.mrb[0].mxu0
        %v2163 = vadd.f32 0.0, %v2162
        %v2164 = vpop.f32.mrb[0].mxu0
        %v2165 = vpop.f32.mrb[0].mxu0
        %v2166 = vadd.f32 0.0, %v2165
        %v2167 = vpop.f32.mrb[0].mxu0
        %2168 = vmatprep.mubr.bf16.mxu0 0
        %2169 = vmatmul.mubr.bf16.gmra.mrb[0].mxu0 %v2040
        %v2170 = vpop.f32.mrb[0].mxu0
        %v2171 = vadd.f32 0.0, %v2170
        %v2172 = vpop.f32.mrb[0].mxu0
        %v2173 = vpop.f32.mrb[0].mxu0
        %v2174 = vadd.f32 0.0, %v2173
        %v2175 = vpop.f32.mrb[0].mxu0
        %2176 = vmatprep.mubr.bf16.mxu0 0
        %2177 = vmatmul.mubr.bf16.gmra.mrb[0].mxu0 %v2043
        %v2178 = vpop.f32.mrb[0].mxu0
        %v2179 = vadd.f32 0.0, %v2178
        %v2180 = vpop.f32.mrb[0].mxu0
        %v2181 = vpop.f32.mrb[0].mxu0
        %v2182 = vadd.f32 0.0, %v2181
        %v2183 = vpop.f32.mrb[0].mxu0
        %2184 = vmatprep.mubr.bf16.mxu0 0
        %2185 = vmatmul.mubr.bf16.gmra.mrb[0].mxu0 %v2046
        %v2186 = vpop.f32.mrb[0].mxu0
        %v2187 = vadd.f32 0.0, %v2186
        %v2188 = vpop.f32.mrb[0].mxu0
        %v2189 = vpop.f32.mrb[0].mxu0
        %v2190 = vadd.f32 0.0, %v2189
        %v2191 = vpop.f32.mrb[0].mxu0
        %2192 = vmatprep.mubr.bf16.mxu0 0
        %2193 = vmatmul.mubr.bf16.gmra.mrb[0].mxu0 %v2049
        %v2194 = vpop.f32.mrb[0].mxu0
        %v2195 = vadd.f32 0.0, %v2194
        %v2196 = vpop.f32.mrb[0].mxu0
        %v2197 = vpop.f32.mrb[0].mxu0
        %v2198 = vadd.f32 0.0, %v2197
        %v2199 = vpop.f32.mrb[0].mxu0
        %2200 = vmatprep.mubr.bf16.mxu0 0
        %2201 = vmatmul.mubr.bf16.gmra.mrb[0].mxu0 %v2052
        %v2202 = vpop.f32.mrb[0].mxu0
        %v2203 = vadd.f32 0.0, %v2202
        %v2204 = vpop.f32.mrb[0].mxu0
        %v2205 = vpop.f32.mrb[0].mxu0
        %v2206 = vadd.f32 0.0, %v2205
        %v2207 = vpop.f32.mrb[0].mxu0
        %2208 = vmatprep.mubr.bf16.mxu0 0
        %2209 = vmatmul.mubr.bf16.gmra.mrb[0].mxu0 %v2055
        %v2210 = vpop.f32.mrb[0].mxu0
        %v2211 = vadd.f32 0.0, %v2210
        %v2212 = vpop.f32.mrb[0].mxu0
        %v2213 = vpop.f32.mrb[0].mxu0
        %v2214 = vadd.f32 0.0, %v2213
        %v2215 = vpop.f32.mrb[0].mxu0
        %2216 = vmatprep.mubr.bf16.mxu0 0
        %2217 = vmatmul.mubr.bf16.gmra.mrb[0].mxu0 %v2058
        %v2218 = vpop.f32.mrb[0].mxu0
        %v2219 = vadd.f32 0.0, %v2218
        %v2220 = vpop.f32.mrb[0].mxu0
        %v2221 = vpop.f32.mrb[0].mxu0
        %v2222 = vadd.f32 0.0, %v2221
        %v2223 = vpop.f32.mrb[0].mxu0
        %2224 = vdwg.mxu0
        %v2225 = vld [vmem:[%s2] sm:$0x1]
        %v2227 = vlaneseq
        %v2228 = vshrl.u32 %v2227, 7
        %v2229 = vsub.s32 0, %v2228
        %v2230 = vrot.slane %v2225, %v2229
        %v2232 = vmul.f32 %v2099, %v2230
        %v2233 = vmul.f32 %v2102, %v2230
        %v2234 = vmul.f32 %v2107, %v2230
        %v2235 = vmul.f32 %v2110, %v2230
        %v2236 = vmul.f32 %v2115, %v2230
        %v2237 = vmul.f32 %v2118, %v2230
        %v2238 = vmul.f32 %v2123, %v2230
        %v2239 = vmul.f32 %v2126, %v2230
        %v2240 = vmul.f32 %v2131, %v2230
        %v2241 = vmul.f32 %v2134, %v2230
        %v2242 = vmul.f32 %v2139, %v2230
        %v2243 = vmul.f32 %v2142, %v2230
        %v2244 = vmul.f32 %v2147, %v2230
        %v2245 = vmul.f32 %v2150, %v2230
        %v2246 = vmul.f32 %v2155, %v2230
        %v2247 = vmul.f32 %v2158, %v2230
        %v2248 = vmul.f32 %v2163, %v2230
        %v2249 = vmul.f32 %v2166, %v2230
        %v2250 = vmul.f32 %v2171, %v2230
        %v2251 = vmul.f32 %v2174, %v2230
        %v2252 = vmul.f32 %v2179, %v2230
        %v2253 = vmul.f32 %v2182, %v2230
        %v2254 = vmul.f32 %v2187, %v2230
        %v2255 = vmul.f32 %v2190, %v2230
        %v2256 = vmul.f32 %v2195, %v2230
        %v2257 = vmul.f32 %v2198, %v2230
        %v2258 = vmul.f32 %v2203, %v2230
        %v2259 = vmul.f32 %v2206, %v2230
        %v2260 = vmul.f32 %v2211, %v2230
        %v2261 = vmul.f32 %v2214, %v2230
        %v2262 = vmul.f32 %v2219, %v2230
        %v2263 = vmul.f32 %v2222, %v2230
        %v2264 = vld [vmem:[%s3] sm:$0x1]
        %v2266 = vlaneseq
        %v2267 = vshrl.u32 %v2266, 7
        %v2268 = vsub.s32 0, %v2267
        %v2269 = vrot.slane %v2264, %v2268
        %v2271 = vadd.f32 %v2232, %v2269
        %v2272 = vadd.f32 %v2233, %v2269
        %v2273 = vadd.f32 %v2234, %v2269
        %v2274 = vadd.f32 %v2235, %v2269
        %v2275 = vadd.f32 %v2236, %v2269
        %v2276 = vadd.f32 %v2237, %v2269
        %v2277 = vadd.f32 %v2238, %v2269
        %v2278 = vadd.f32 %v2239, %v2269
        %v2279 = vadd.f32 %v2240, %v2269
        %v2280 = vadd.f32 %v2241, %v2269
        %v2281 = vadd.f32 %v2242, %v2269
        %v2282 = vadd.f32 %v2243, %v2269
        %v2283 = vadd.f32 %v2244, %v2269
        %v2284 = vadd.f32 %v2245, %v2269
        %v2285 = vadd.f32 %v2246, %v2269
        %v2286 = vadd.f32 %v2247, %v2269
        %v2287 = vadd.f32 %v2248, %v2269
        %v2288 = vadd.f32 %v2249, %v2269
        %v2289 = vadd.f32 %v2250, %v2269
        %v2290 = vadd.f32 %v2251, %v2269
        %v2291 = vadd.f32 %v2252, %v2269
        %v2292 = vadd.f32 %v2253, %v2269
        %v2293 = vadd.f32 %v2254, %v2269
        %v2294 = vadd.f32 %v2255, %v2269
        %v2295 = vadd.f32 %v2256, %v2269
        %v2296 = vadd.f32 %v2257, %v2269
        %v2297 = vadd.f32 %v2258, %v2269
        %v2298 = vadd.f32 %v2259, %v2269
        %v2299 = vadd.f32 %v2260, %v2269
        %v2300 = vadd.f32 %v2261, %v2269
        %v2301 = vadd.f32 %v2262, %v2269
        %v2302 = vadd.f32 %v2263, %v2269
        %v2303 = vmax.f32 %v2271, 0.0
        %v2304 = vmax.f32 %v2272, 0.0
        %v2305 = vmax.f32 %v2273, 0.0
        %v2306 = vmax.f32 %v2274, 0.0
        %v2307 = vmax.f32 %v2275, 0.0
        %v2308 = vmax.f32 %v2276, 0.0
        %v2309 = vmax.f32 %v2277, 0.0
        %v2310 = vmax.f32 %v2278, 0.0
        %v2311 = vmax.f32 %v2279, 0.0
        %v2312 = vmax.f32 %v2280, 0.0
        %v2313 = vmax.f32 %v2281, 0.0
        %v2314 = vmax.f32 %v2282, 0.0
        %v2315 = vmax.f32 %v2283, 0.0
        %v2316 = vmax.f32 %v2284, 0.0
        %v2317 = vmax.f32 %v2285, 0.0
        %v2318 = vmax.f32 %v2286, 0.0
        %v2319 = vmax.f32 %v2287, 0.0
        %v2320 = vmax.f32 %v2288, 0.0
        %v2321 = vmax.f32 %v2289, 0.0
        %v2322 = vmax.f32 %v2290, 0.0
        %v2323 = vmax.f32 %v2291, 0.0
        %v2324 = vmax.f32 %v2292, 0.0
        %v2325 = vmax.f32 %v2293, 0.0
        %v2326 = vmax.f32 %v2294, 0.0
        %v2327 = vmax.f32 %v2295, 0.0
        %v2328 = vmax.f32 %v2296, 0.0
        %v2329 = vmax.f32 %v2297, 0.0
        %v2330 = vmax.f32 %v2298, 0.0
        %v2331 = vmax.f32 %v2299, 0.0
        %v2332 = vmax.f32 %v2300, 0.0
        %v2333 = vmax.f32 %v2301, 0.0
        %v2334 = vmax.f32 %v2302, 0.0
        %v2335 = vmax.f32 %v2303, %v2305
        %v2336 = vmax.f32 %v2304, %v2306
        %v2337 = vmax.f32 %v2307, %v2309
        %v2338 = vmax.f32 %v2308, %v2310
        %v2339 = vmax.f32 %v2311, %v2313
        %v2340 = vmax.f32 %v2312, %v2314
        %v2341 = vmax.f32 %v2315, %v2317
        %v2342 = vmax.f32 %v2316, %v2318
        %v2343 = vmax.f32 %v2319, %v2321
        %v2344 = vmax.f32 %v2320, %v2322
        %v2345 = vmax.f32 %v2323, %v2325
        %v2346 = vmax.f32 %v2324, %v2326
        %v2347 = vmax.f32 %v2327, %v2329
        %v2348 = vmax.f32 %v2328, %v2330
        %v2349 = vmax.f32 %v2331, %v2333
        %v2350 = vmax.f32 %v2332, %v2334
        %2351 = vst.msk [vmem:[#allocation3] sm:$0xff] %vm1744, %v2335
        %2352 = vst.msk [vmem:[#allocation3 + $0x8] sm:$0xff] %vm1744, %v2336
        %2353 = vst.msk [vmem:[#allocation3 + $0x10] sm:$0xff] %vm1744, %v2337
        %2354 = vst.msk [vmem:[#allocation3 + $0x18] sm:$0xff] %vm1744, %v2338
        %2355 = vst.msk [vmem:[#allocation3 + $0x20] sm:$0xff] %vm1744, %v2339
        %2356 = vst.msk [vmem:[#allocation3 + $0x28] sm:$0xff] %vm1744, %v2340
        %2357 = vst.msk [vmem:[#allocation3 + $0x30] sm:$0xff] %vm1744, %v2341
        %2358 = vst.msk [vmem:[#allocation3 + $0x38] sm:$0xff] %vm1744, %v2342
        %2359 = vst.msk [vmem:[#allocation3 + $0x40] sm:$0xff] %vm1744, %v2343
        %2360 = vst.msk [vmem:[#allocation3 + $0x48] sm:$0xff] %vm1744, %v2344
        %2361 = vst.msk [vmem:[#allocation3 + $0x50] sm:$0xff] %vm1744, %v2345
        %2362 = vst.msk [vmem:[#allocation3 + $0x58] sm:$0xff] %vm1744, %v2346
        %2363 = vst.msk [vmem:[#allocation3 + $0x60] sm:$0xff] %vm1744, %v2347
        %2364 = vst.msk [vmem:[#allocation3 + $0x68] sm:$0xff] %vm1744, %v2348
        %2365 = vst.msk [vmem:[#allocation3 + $0x70] sm:$0xff] %vm1744, %v2349
        %2366 = vst.msk [vmem:[#allocation3 + $0x78] sm:$0xff] %vm1744, %v2350
        %v2367 = vld [vmem:[#allocation3] ss:$2 sm:$0xff]
        %s2368 = scalar_lea.vmem [#allocation3], 16
        %v2369 = vld [vmem:[%s2368] ss:$2 sm:$0xff]
        %s2370 = scalar_lea.vmem [#allocation3], 32
        %v2371 = vld [vmem:[%s2370] ss:$2 sm:$0xff]
        %s2372 = scalar_lea.vmem [#allocation3], 48
        %v2373 = vld [vmem:[%s2372] ss:$2 sm:$0xff]
        %s2374 = scalar_lea.vmem [#allocation3], 64
        %v2375 = vld [vmem:[%s2374] ss:$2 sm:$0xff]
        %s2376 = scalar_lea.vmem [#allocation3], 80
        %v2377 = vld [vmem:[%s2376] ss:$2 sm:$0xff]
        %s2378 = scalar_lea.vmem [#allocation3], 96
        %v2379 = vld [vmem:[%s2378] ss:$2 sm:$0xff]
        %s2380 = scalar_lea.vmem [#allocation3], 112
        %v2381 = vld [vmem:[%s2380] ss:$2 sm:$0xff]
        %s2382 = scalar_lea.vmem [#allocation3], 1
        %v2383 = vld [vmem:[%s2382] ss:$2 sm:$0xff]
        %s2384 = scalar_lea.vmem [#allocation3], 17
        %v2385 = vld [vmem:[%s2384] ss:$2 sm:$0xff]
        %s2386 = scalar_lea.vmem [#allocation3], 33
        %v2387 = vld [vmem:[%s2386] ss:$2 sm:$0xff]
        %s2388 = scalar_lea.vmem [#allocation3], 49
        %v2389 = vld [vmem:[%s2388] ss:$2 sm:$0xff]
        %s2390 = scalar_lea.vmem [#allocation3], 65
        %v2391 = vld [vmem:[%s2390] ss:$2 sm:$0xff]
        %s2392 = scalar_lea.vmem [#allocation3], 81
        %v2393 = vld [vmem:[%s2392] ss:$2 sm:$0xff]
        %s2394 = scalar_lea.vmem [#allocation3], 97
        %v2395 = vld [vmem:[%s2394] ss:$2 sm:$0xff]
        %s2396 = scalar_lea.vmem [#allocation3], 113
        %v2397 = vld [vmem:[%s2396] ss:$2 sm:$0xff]
        %v2398 = vmax.f32 %v2367, %v2383
        %v2399 = vmax.f32 %v2369, %v2385
        %v2400 = vmax.f32 %v2371, %v2387
        %v2401 = vmax.f32 %v2373, %v2389
        %v2402 = vmax.f32 %v2375, %v2391
        %v2403 = vmax.f32 %v2377, %v2393
        %v2404 = vmax.f32 %v2379, %v2395
        %v2405 = vmax.f32 %v2381, %v2397
        %2406 = vst.msk [vmem:[#allocation4] sm:$0xff] %vm1744, 0.0
        %vm2407 = vcmask 58368
        %2408 = vst.msk [vmem:[#allocation4 + $0x8] sm:$0x3] %vm2407, 0.0
        %2409 = vst.msk [vmem:[#allocation4 + $0x10] sm:$0xff] %vm1744, 0.0
        %2410 = vst.msk [vmem:[#allocation4 + $0x18] sm:$0x3] %vm2407, 0.0
        %2411 = vst.msk [vmem:[#allocation4 + $0x20] sm:$0xff] %vm1744, 0.0
        %2412 = vst.msk [vmem:[#allocation4 + $0x28] sm:$0x3] %vm2407, 0.0
        %2413 = vst.msk [vmem:[#allocation4 + $0x30] sm:$0xff] %vm1744, 0.0
        %2414 = vst.msk [vmem:[#allocation4 + $0x38] sm:$0x3] %vm2407, 0.0
        %2415 = vst.msk [vmem:[#allocation4 + $0x40] sm:$0xff] %vm1744, 0.0
        %2416 = vst.msk [vmem:[#allocation4 + $0x48] sm:$0x3] %vm2407, 0.0
        %2417 = vst.msk [vmem:[#allocation4 + $0x50] sm:$0xff] %vm1744, 0.0
        %2418 = vst.msk [vmem:[#allocation4 + $0x58] sm:$0x3] %vm2407, 0.0
        %2419 = vst.msk [vmem:[#allocation4 + $0x60] sm:$0xff] %vm1744, 0.0
        %2420 = vst.msk [vmem:[#allocation4 + $0x68] sm:$0x3] %vm2407, 0.0
        %2421 = vst.msk [vmem:[#allocation4 + $0x70] sm:$0xff] %vm1744, 0.0
        %2422 = vst.msk [vmem:[#allocation4 + $0x78] sm:$0x3] %vm2407, 0.0
        %2423 = vst.msk [vmem:[#allocation4 + $0x80] sm:$0xff] %vm1744, 0.0
        %2424 = vst.msk [vmem:[#allocation4 + $0x88] sm:$0x3] %vm2407, 0.0
        %2425 = vst.msk [vmem:[#allocation4 + $0x90] sm:$0xff] %vm1744, 0.0
        %2426 = vst.msk [vmem:[#allocation4 + $0x98] sm:$0x3] %vm2407, 0.0
        %s2427 = scalar_lea.vmem [#allocation4], 16
        %2428 = vst.msk [vmem:[%s2427 + $0x1] sm:$0xff] %vm1744, %v2398
        %2429 = vst.msk [vmem:[%s2427 + $0x11] sm:$0xff] %vm1744, %v2399
        %2430 = vst.msk [vmem:[%s2427 + $0x21] sm:$0xff] %vm1744, %v2400
        %2431 = vst.msk [vmem:[%s2427 + $0x31] sm:$0xff] %vm1744, %v2401
        %2432 = vst.msk [vmem:[%s2427 + $0x41] sm:$0xff] %vm1744, %v2402
        %2433 = vst.msk [vmem:[%s2427 + $0x51] sm:$0xff] %vm1744, %v2403
        %2434 = vst.msk [vmem:[%s2427 + $0x61] sm:$0xff] %vm1744, %v2404
        %2435 = vst.msk [vmem:[%s2427 + $0x71] sm:$0xff] %vm1744, %v2405
        %v2436 = vld [vmem:[#allocation4] sm:$0xff]
        %v2437 = vld [vmem:[#allocation4 + $0x10] sm:$0xff]
        %v2438 = vld [vmem:[#allocation4 + $0x20] sm:$0xff]
        %v2439 = vld [vmem:[#allocation4 + $0x30] sm:$0xff]
        %v2440 = vld [vmem:[#allocation4 + $0x40] sm:$0xff]
        %v2441 = vld [vmem:[#allocation4 + $0x50] sm:$0xff]
        %v2442 = vld [vmem:[#allocation4 + $0x60] sm:$0xff]
        %v2443 = vld [vmem:[#allocation4 + $0x70] sm:$0xff]
        %v2444 = vld [vmem:[#allocation4 + $0x1] sm:$0xff]
        %v2445 = vld [vmem:[#allocation4 + $0x11] sm:$0xff]
        %v2446 = vld [vmem:[#allocation4 + $0x21] sm:$0xff]
        %v2447 = vld [vmem:[#allocation4 + $0x31] sm:$0xff]
        %v2448 = vld [vmem:[#allocation4 + $0x41] sm:$0xff]
        %v2449 = vld [vmem:[#allocation4 + $0x51] sm:$0xff]
        %v2450 = vld [vmem:[#allocation4 + $0x61] sm:$0xff]
        %v2451 = vld [vmem:[#allocation4 + $0x71] sm:$0xff]
        %v2452 = vld [vmem:[#allocation4 + $0x2] sm:$0xff]
        %v2453 = vld [vmem:[#allocation4 + $0x12] sm:$0xff]
        %v2454 = vld [vmem:[#allocation4 + $0x22] sm:$0xff]
        %v2455 = vld [vmem:[#allocation4 + $0x32] sm:$0xff]
        %v2456 = vld [vmem:[#allocation4 + $0x42] sm:$0xff]
        %v2457 = vld [vmem:[#allocation4 + $0x52] sm:$0xff]
        %v2458 = vld [vmem:[#allocation4 + $0x62] sm:$0xff]
        %v2459 = vld [vmem:[#allocation4 + $0x72] sm:$0xff]
        %v2460 = vld [vmem:[%s2427] sm:$0xff]
        %v2461 = vld [vmem:[%s2427 + $0x10] sm:$0xff]
        %v2462 = vld [vmem:[%s2427 + $0x20] sm:$0xff]
        %v2463 = vld [vmem:[%s2427 + $0x30] sm:$0xff]
        %v2464 = vld [vmem:[%s2427 + $0x40] sm:$0xff]
        %v2465 = vld [vmem:[%s2427 + $0x50] sm:$0xff]
        %v2466 = vld [vmem:[%s2427 + $0x60] sm:$0xff]
        %v2467 = vld [vmem:[%s2427 + $0x70] sm:$0xff]
        %v2468 = vld [vmem:[%s2427 + $0x1] sm:$0xff]
        %v2469 = vld [vmem:[%s2427 + $0x11] sm:$0xff]
        %v2470 = vld [vmem:[%s2427 + $0x21] sm:$0xff]
        %v2471 = vld [vmem:[%s2427 + $0x31] sm:$0xff]
        %v2472 = vld [vmem:[%s2427 + $0x41] sm:$0xff]
        %v2473 = vld [vmem:[%s2427 + $0x51] sm:$0xff]
        %v2474 = vld [vmem:[%s2427 + $0x61] sm:$0xff]
        %v2475 = vld [vmem:[%s2427 + $0x71] sm:$0xff]
        %v2476 = vld [vmem:[%s2427 + $0x2] sm:$0xff]
        %v2477 = vld [vmem:[%s2427 + $0x12] sm:$0xff]
        %v2478 = vld [vmem:[%s2427 + $0x22] sm:$0xff]
        %v2479 = vld [vmem:[%s2427 + $0x32] sm:$0xff]
        %v2480 = vld [vmem:[%s2427 + $0x42] sm:$0xff]
        %v2481 = vld [vmem:[%s2427 + $0x52] sm:$0xff]
        %v2482 = vld [vmem:[%s2427 + $0x62] sm:$0xff]
        %v2483 = vld [vmem:[%s2427 + $0x72] sm:$0xff]
        %s2484 = scalar_lea.vmem [#allocation4], 32
        %v2485 = vld [vmem:[%s2484] sm:$0xff]
        %v2486 = vld [vmem:[%s2484 + $0x10] sm:$0xff]
        %v2487 = vld [vmem:[%s2484 + $0x20] sm:$0xff]
        %v2488 = vld [vmem:[%s2484 + $0x30] sm:$0xff]
        %v2489 = vld [vmem:[%s2484 + $0x40] sm:$0xff]
        %v2490 = vld [vmem:[%s2484 + $0x50] sm:$0xff]
        %v2491 = vld [vmem:[%s2484 + $0x60] sm:$0xff]
        %v2492 = vld [vmem:[%s2484 + $0x70] sm:$0xff]
        %v2493 = vld [vmem:[%s2484 + $0x1] sm:$0xff]
        %v2494 = vld [vmem:[%s2484 + $0x11] sm:$0xff]
        %v2495 = vld [vmem:[%s2484 + $0x21] sm:$0xff]
        %v2496 = vld [vmem:[%s2484 + $0x31] sm:$0xff]
        %v2497 = vld [vmem:[%s2484 + $0x41] sm:$0xff]
        %v2498 = vld [vmem:[%s2484 + $0x51] sm:$0xff]
        %v2499 = vld [vmem:[%s2484 + $0x61] sm:$0xff]
        %v2500 = vld [vmem:[%s2484 + $0x71] sm:$0xff]
        %v2501 = vld [vmem:[%s2484 + $0x2] sm:$0xff]
        %v2502 = vld [vmem:[%s2484 + $0x12] sm:$0xff]
        %v2503 = vld [vmem:[%s2484 + $0x22] sm:$0xff]
        %v2504 = vld [vmem:[%s2484 + $0x32] sm:$0xff]
        %v2505 = vld [vmem:[%s2484 + $0x42] sm:$0xff]
        %v2506 = vld [vmem:[%s2484 + $0x52] sm:$0xff]
        %v2507 = vld [vmem:[%s2484 + $0x62] sm:$0xff]
        %v2508 = vld [vmem:[%s2484 + $0x72] sm:$0xff]
        %2517 = vrot.lane.b32.xlu0 %v2444, 8
        %v2518 = vpop.permute.xlu0 %2517
        %2519 = vrot.lane.b32.xlu0 %v2445, 8
        %v2520 = vpop.permute.xlu0 %2519
        %2521 = vrot.lane.b32.xlu0 %v2446, 8
        %v2522 = vpop.permute.xlu0 %2521
        %2523 = vrot.lane.b32.xlu0 %v2447, 8
        %v2524 = vpop.permute.xlu0 %2523
        %2525 = vrot.lane.b32.xlu0 %v2448, 8
        %v2526 = vpop.permute.xlu0 %2525
        %2527 = vrot.lane.b32.xlu0 %v2449, 8
        %v2528 = vpop.permute.xlu0 %2527
        %2529 = vrot.lane.b32.xlu0 %v2450, 8
        %v2530 = vpop.permute.xlu0 %2529
        %2531 = vrot.lane.b32.xlu0 %v2451, 8
        %v2532 = vpop.permute.xlu0 %2531
        %2549 = vrot.lane.b32.xlu0 %v2452, 16
        %v2550 = vpop.permute.xlu0 %2549
        %2551 = vrot.lane.b32.xlu0 %v2453, 16
        %v2552 = vpop.permute.xlu0 %2551
        %2553 = vrot.lane.b32.xlu0 %v2454, 16
        %v2554 = vpop.permute.xlu0 %2553
        %2555 = vrot.lane.b32.xlu0 %v2455, 16
        %v2556 = vpop.permute.xlu0 %2555
        %2557 = vrot.lane.b32.xlu0 %v2456, 16
        %v2558 = vpop.permute.xlu0 %2557
        %2559 = vrot.lane.b32.xlu0 %v2457, 16
        %v2560 = vpop.permute.xlu0 %2559
        %2561 = vrot.lane.b32.xlu0 %v2458, 16
        %v2562 = vpop.permute.xlu0 %2561
        %2563 = vrot.lane.b32.xlu0 %v2459, 16
        %v2564 = vpop.permute.xlu0 %2563
        %2581 = vrot.lane.b32.xlu0 %v2460, 24
        %v2582 = vpop.permute.xlu0 %2581
        %2583 = vrot.lane.b32.xlu0 %v2461, 24
        %v2584 = vpop.permute.xlu0 %2583
        %2585 = vrot.lane.b32.xlu0 %v2462, 24
        %v2586 = vpop.permute.xlu0 %2585
        %2587 = vrot.lane.b32.xlu0 %v2463, 24
        %v2588 = vpop.permute.xlu0 %2587
        %2589 = vrot.lane.b32.xlu0 %v2464, 24
        %v2590 = vpop.permute.xlu0 %2589
        %2591 = vrot.lane.b32.xlu0 %v2465, 24
        %v2592 = vpop.permute.xlu0 %2591
        %2593 = vrot.lane.b32.xlu0 %v2466, 24
        %v2594 = vpop.permute.xlu0 %2593
        %2595 = vrot.lane.b32.xlu0 %v2467, 24
        %v2596 = vpop.permute.xlu0 %2595
        %2613 = vrot.lane.b32.xlu0 %v2468, 32
        %v2614 = vpop.permute.xlu0 %2613
        %2615 = vrot.lane.b32.xlu0 %v2469, 32
        %v2616 = vpop.permute.xlu0 %2615
        %2617 = vrot.lane.b32.xlu0 %v2470, 32
        %v2618 = vpop.permute.xlu0 %2617
        %2619 = vrot.lane.b32.xlu0 %v2471, 32
        %v2620 = vpop.permute.xlu0 %2619
        %2621 = vrot.lane.b32.xlu0 %v2472, 32
        %v2622 = vpop.permute.xlu0 %2621
        %2623 = vrot.lane.b32.xlu0 %v2473, 32
        %v2624 = vpop.permute.xlu0 %2623
        %2625 = vrot.lane.b32.xlu0 %v2474, 32
        %v2626 = vpop.permute.xlu0 %2625
        %2627 = vrot.lane.b32.xlu0 %v2475, 32
        %v2628 = vpop.permute.xlu0 %2627
        %2645 = vrot.lane.b32.xlu0 %v2476, 40
        %v2646 = vpop.permute.xlu0 %2645
        %2647 = vrot.lane.b32.xlu0 %v2477, 40
        %v2648 = vpop.permute.xlu0 %2647
        %2649 = vrot.lane.b32.xlu0 %v2478, 40
        %v2650 = vpop.permute.xlu0 %2649
        %2651 = vrot.lane.b32.xlu0 %v2479, 40
        %v2652 = vpop.permute.xlu0 %2651
        %2653 = vrot.lane.b32.xlu0 %v2480, 40
        %v2654 = vpop.permute.xlu0 %2653
        %2655 = vrot.lane.b32.xlu0 %v2481, 40
        %v2656 = vpop.permute.xlu0 %2655
        %2657 = vrot.lane.b32.xlu0 %v2482, 40
        %v2658 = vpop.permute.xlu0 %2657
        %2659 = vrot.lane.b32.xlu0 %v2483, 40
        %v2660 = vpop.permute.xlu0 %2659
        %2677 = vrot.lane.b32.xlu0 %v2485, 48
        %v2678 = vpop.permute.xlu0 %2677
        %2679 = vrot.lane.b32.xlu0 %v2486, 48
        %v2680 = vpop.permute.xlu0 %2679
        %2681 = vrot.lane.b32.xlu0 %v2487, 48
        %v2682 = vpop.permute.xlu0 %2681
        %2683 = vrot.lane.b32.xlu0 %v2488, 48
        %v2684 = vpop.permute.xlu0 %2683
        %2685 = vrot.lane.b32.xlu0 %v2489, 48
        %v2686 = vpop.permute.xlu0 %2685
        %2687 = vrot.lane.b32.xlu0 %v2490, 48
        %v2688 = vpop.permute.xlu0 %2687
        %2689 = vrot.lane.b32.xlu0 %v2491, 48
        %v2690 = vpop.permute.xlu0 %2689
        %2691 = vrot.lane.b32.xlu0 %v2492, 48
        %v2692 = vpop.permute.xlu0 %2691
        %2709 = vrot.lane.b32.xlu0 %v2493, 56
        %v2710 = vpop.permute.xlu0 %2709
        %2711 = vrot.lane.b32.xlu0 %v2494, 56
        %v2712 = vpop.permute.xlu0 %2711
        %2713 = vrot.lane.b32.xlu0 %v2495, 56
        %v2714 = vpop.permute.xlu0 %2713
        %2715 = vrot.lane.b32.xlu0 %v2496, 56
        %v2716 = vpop.permute.xlu0 %2715
        %2717 = vrot.lane.b32.xlu0 %v2497, 56
        %v2718 = vpop.permute.xlu0 %2717
        %2719 = vrot.lane.b32.xlu0 %v2498, 56
        %v2720 = vpop.permute.xlu0 %2719
        %2721 = vrot.lane.b32.xlu0 %v2499, 56
        %v2722 = vpop.permute.xlu0 %2721
        %2723 = vrot.lane.b32.xlu0 %v2500, 56
        %v2724 = vpop.permute.xlu0 %2723
        %2741 = vrot.lane.b32.xlu0 %v2501, 64
        %v2742 = vpop.permute.xlu0 %2741
        %2743 = vrot.lane.b32.xlu0 %v2502, 64
        %v2744 = vpop.permute.xlu0 %2743
        %2745 = vrot.lane.b32.xlu0 %v2503, 64
        %v2746 = vpop.permute.xlu0 %2745
        %2747 = vrot.lane.b32.xlu0 %v2504, 64
        %v2748 = vpop.permute.xlu0 %2747
        %2749 = vrot.lane.b32.xlu0 %v2505, 64
        %v2750 = vpop.permute.xlu0 %2749
        %2751 = vrot.lane.b32.xlu0 %v2506, 64
        %v2752 = vpop.permute.xlu0 %2751
        %2753 = vrot.lane.b32.xlu0 %v2507, 64
        %v2754 = vpop.permute.xlu0 %2753
        %2755 = vrot.lane.b32.xlu0 %v2508, 64
        %v2756 = vpop.permute.xlu0 %2755
        %v2765 = vsel %vm1744, %v2436, %v2518
        %v2766 = vsel %vm1744, %v2437, %v2520
        %v2767 = vsel %vm1744, %v2438, %v2522
        %v2768 = vsel %vm1744, %v2439, %v2524
        %v2769 = vsel %vm1744, %v2440, %v2526
        %v2770 = vsel %vm1744, %v2441, %v2528
        %v2771 = vsel %vm1744, %v2442, %v2530
        %v2772 = vsel %vm1744, %v2443, %v2532
        %v2773 = vsel %vm1810, %v2765, %v2550
        %v2774 = vsel %vm1810, %v2766, %v2552
        %v2775 = vsel %vm1810, %v2767, %v2554
        %v2776 = vsel %vm1810, %v2768, %v2556
        %v2777 = vsel %vm1810, %v2769, %v2558
        %v2778 = vsel %vm1810, %v2770, %v2560
        %v2779 = vsel %vm1810, %v2771, %v2562
        %v2780 = vsel %vm1810, %v2772, %v2564
        %v2781 = vsel %vm1876, %v2773, %v2582
        %v2782 = vsel %vm1876, %v2774, %v2584
        %v2783 = vsel %vm1876, %v2775, %v2586
        %v2784 = vsel %vm1876, %v2776, %v2588
        %v2785 = vsel %vm1876, %v2777, %v2590
        %v2786 = vsel %vm1876, %v2778, %v2592
        %v2787 = vsel %vm1876, %v2779, %v2594
        %v2788 = vsel %vm1876, %v2780, %v2596
        %v2789 = vsel %vm1942, %v2781, %v2614
        %v2790 = vsel %vm1942, %v2782, %v2616
        %v2791 = vsel %vm1942, %v2783, %v2618
        %v2792 = vsel %vm1942, %v2784, %v2620
        %v2793 = vsel %vm1942, %v2785, %v2622
        %v2794 = vsel %vm1942, %v2786, %v2624
        %v2795 = vsel %vm1942, %v2787, %v2626
        %v2796 = vsel %vm1942, %v2788, %v2628
        %vm2797 = vcmask 326656
        %v2798 = vsel %vm2797, %v2789, %v2646
        %v2799 = vsel %vm2797, %v2790, %v2648
        %v2800 = vsel %vm2797, %v2791, %v2650
        %v2801 = vsel %vm2797, %v2792, %v2652
        %v2802 = vsel %vm2797, %v2793, %v2654
        %v2803 = vsel %vm2797, %v2794, %v2656
        %v2804 = vsel %vm2797, %v2795, %v2658
        %v2805 = vsel %vm2797, %v2796, %v2660
        %vm2806 = vcmask 392192
        %v2807 = vsel %vm2806, %v2798, %v2678
        %v2808 = vsel %vm2806, %v2799, %v2680
        %v2809 = vsel %vm2806, %v2800, %v2682
        %v2810 = vsel %vm2806, %v2801, %v2684
        %v2811 = vsel %vm2806, %v2802, %v2686
        %v2812 = vsel %vm2806, %v2803, %v2688
        %v2813 = vsel %vm2806, %v2804, %v2690
        %v2814 = vsel %vm2806, %v2805, %v2692
        %vm2815 = vcmask 457728
        %v2816 = vsel %vm2815, %v2807, %v2710
        %v2817 = vsel %vm2815, %v2808, %v2712
        %v2818 = vsel %vm2815, %v2809, %v2714
        %v2819 = vsel %vm2815, %v2810, %v2716
        %v2820 = vsel %vm2815, %v2811, %v2718
        %v2821 = vsel %vm2815, %v2812, %v2720
        %v2822 = vsel %vm2815, %v2813, %v2722
        %v2823 = vsel %vm2815, %v2814, %v2724
        %vm2824 = vcmask 523264
        %v2825 = vsel %vm2824, %v2816, %v2742
        %v2826 = vsel %vm2824, %v2817, %v2744
        %v2827 = vsel %vm2824, %v2818, %v2746
        %v2828 = vsel %vm2824, %v2819, %v2748
        %v2829 = vsel %vm2824, %v2820, %v2750
        %v2830 = vsel %vm2824, %v2821, %v2752
        %v2831 = vsel %vm2824, %v2822, %v2754
        %v2832 = vsel %vm2824, %v2823, %v2756
        %v2833 = vpack.c.bf16 %v2826, %v2825
        %v2834 = vpack.c.bf16 %v2828, %v2827
        %v2835 = vpack.c.bf16 %v2830, %v2829
        %v2836 = vpack.c.bf16 %v2832, %v2831
        %v2837 = vld [vmem:[%s4] sm:$0xf]
        %v2838 = vld [vmem:[%s4 + $0x4] sm:$0xf]
        %v2839 = vld [vmem:[%s4 + $0x8] sm:$0xf]
        %v2840 = vld [vmem:[%s4 + $0xc] sm:$0xf]
        %v2841 = vld [vmem:[%s4 + $0x10] sm:$0xf]
        %v2842 = vld [vmem:[%s4 + $0x14] sm:$0xf]
        %v2843 = vld [vmem:[%s4 + $0x18] sm:$0xf]
        %v2844 = vld [vmem:[%s4 + $0x1c] sm:$0xf]
        %v2845 = vld [vmem:[%s4 + $0x20] sm:$0xf]
        %v2855 = vunpack.c.l.b16 %v2837
        %v2856 = vunpack.c.l.b16 %v2838
        %v2857 = vunpack.c.l.b16 %v2839
        %v2858 = vunpack.c.l.b16 %v2840
        %v2859 = vunpack.c.l.b16 %v2841
        %v2860 = vunpack.c.l.b16 %v2842
        %v2861 = vunpack.c.l.b16 %v2843
        %v2862 = vunpack.c.l.b16 %v2844
        %v2863 = vunpack.c.l.b16 %v2845
        %v2864 = vpack.c.b16 %v2856, %v2855
        %v2865 = vpack.c.b16 %v2858, %v2857
        %v2866 = vpack.c.b16 %v2860, %v2859
        %v2867 = vpack.c.b16 %v2862, %v2861
        %v2868 = vpack.c.b16 %v2863, %v2863
        %vm2873 = vcmask 588800
        %v2875 = vsel %vm2873, %v2833, 0
        %v2878 = vsel %vm2873, %v2834, 0
        %v2881 = vsel %vm2873, %v2835, 0
        %v2884 = vsel %vm2873, %v2836, 0
        %vm2886 = vcmask 1043456
        %v2888 = vsel %vm2886, %v2868, 0
        %2890 = vmatprep.subr.bf16.mxu0 0
        %2891 = vmatpush1.bf16.msra.mxu0 %v2864
        %2892 = vmatprep.subr.bf16.mxu0 0
        %2893 = vmatpush1.bf16.msra.mxu0 %v2865
        %2894 = vmatprep.subr.bf16.mxu0 0
        %2895 = vmatpush1.bf16.msra.mxu0 %v2866
        %2896 = vmatprep.subr.bf16.mxu0 0
        %2897 = vmatpush1.bf16.msra.mxu0 %v2867
        %2898 = vmatprep.subr.bf16.mxu0 0
        %2899 = vmatpush1.bf16.msra.mxu0 %v2888
        %2900 = vmatprep.subr.bf16.mxu0 0
        %2901 = vmatpush1.bf16.msra.mxu0 0
        %2902 = vmatprep.subr.bf16.mxu0 0
        %2903 = vmatpush1.bf16.msra.mxu0 0
        %2904 = vmatprep.subr.bf16.mxu0 0
        %2905 = vmatpush1.bf16.msra.mxu0 0
        %2906 = vmatprep.subr.bf16.mxu0 0
        %2907 = vmatpush1.bf16.msra.mxu0 0
        %2908 = vmatprep.subr.bf16.mxu0 0
        %2909 = vmatpush1.bf16.msra.mxu0 0
        %2910 = vmatprep.subr.bf16.mxu0 0
        %2911 = vmatpush1.bf16.msra.mxu0 0
        %2912 = vmatprep.subr.bf16.mxu0 0
        %2913 = vmatpush1.bf16.msra.mxu0 0
        %2914 = vmatprep.subr.bf16.mxu0 0
        %2915 = vmatpush1.bf16.msra.mxu0 0
        %2916 = vmatprep.subr.bf16.mxu0 0
        %2917 = vmatpush1.bf16.msra.mxu0 0
        %2918 = vmatprep.subr.bf16.mxu0 0
        %2919 = vmatpush1.bf16.msra.mxu0 0
        %2920 = vmatprep.subr.bf16.mxu0 0
        %2921 = vmatpush1.bf16.msra.mxu0 0
        %2922 = vmatprep.mubr.bf16.mxu0 0
        %2923 = vmatmul.mubr.bf16.gmra.mrb[0].mxu0 %v2875
        %v2924 = vpop.f32.mrb[0].mxu0
        %v2925 = vadd.f32 0.0, %v2924
        %v2926 = vpop.f32.mrb[0].mxu0
        %v2927 = vpop.f32.mrb[0].mxu0
        %v2928 = vadd.f32 0.0, %v2927
        %v2929 = vpop.f32.mrb[0].mxu0
        %2930 = vmatprep.mubr.bf16.mxu0 0
        %2931 = vmatmul.mubr.bf16.gmra.mrb[0].mxu0 %v2878
        %v2932 = vpop.f32.mrb[0].mxu0
        %v2933 = vadd.f32 0.0, %v2932
        %v2934 = vpop.f32.mrb[0].mxu0
        %v2935 = vpop.f32.mrb[0].mxu0
        %v2936 = vadd.f32 0.0, %v2935
        %v2937 = vpop.f32.mrb[0].mxu0
        %2938 = vmatprep.mubr.bf16.mxu0 0
        %2939 = vmatmul.mubr.bf16.gmra.mrb[0].mxu0 %v2881
        %v2940 = vpop.f32.mrb[0].mxu0
        %v2941 = vadd.f32 0.0, %v2940
        %v2942 = vpop.f32.mrb[0].mxu0
        %v2943 = vpop.f32.mrb[0].mxu0
        %v2944 = vadd.f32 0.0, %v2943
        %v2945 = vpop.f32.mrb[0].mxu0
        %2946 = vmatprep.mubr.bf16.mxu0 0
        %2947 = vmatmul.mubr.bf16.gmra.mrb[0].mxu0 %v2884
        %v2948 = vpop.f32.mrb[0].mxu0
        %v2949 = vadd.f32 0.0, %v2948
        %v2950 = vpop.f32.mrb[0].mxu0
        %v2951 = vpop.f32.mrb[0].mxu0
        %v2952 = vadd.f32 0.0, %v2951
        %v2953 = vpop.f32.mrb[0].mxu0
        %2954 = vdwg.mxu0
        %v2955 = vld [vmem:[%s5] sm:$0x1]
        %v2957 = vlaneseq
        %v2958 = vshrl.u32 %v2957, 7
        %v2959 = vsub.s32 0, %v2958
        %v2960 = vrot.slane %v2955, %v2959
        %v2962 = vmul.f32 %v2925, %v2960
        %v2963 = vmul.f32 %v2928, %v2960
        %v2964 = vmul.f32 %v2933, %v2960
        %v2965 = vmul.f32 %v2936, %v2960
        %v2966 = vmul.f32 %v2941, %v2960
        %v2967 = vmul.f32 %v2944, %v2960
        %v2968 = vmul.f32 %v2949, %v2960
        %v2969 = vmul.f32 %v2952, %v2960
        %v2970 = vld [vmem:[%s6] sm:$0x1]
        %v2972 = vlaneseq
        %v2973 = vshrl.u32 %v2972, 7
        %v2974 = vsub.s32 0, %v2973
        %v2975 = vrot.slane %v2970, %v2974
        %v2977 = vadd.f32 %v2962, %v2975
        %v2978 = vadd.f32 %v2963, %v2975
        %v2979 = vadd.f32 %v2964, %v2975
        %v2980 = vadd.f32 %v2965, %v2975
        %v2981 = vadd.f32 %v2966, %v2975
        %v2982 = vadd.f32 %v2967, %v2975
        %v2983 = vadd.f32 %v2968, %v2975
        %v2984 = vadd.f32 %v2969, %v2975
        %v2985 = vmax.f32 %v2977, 0.0
        %v2986 = vmax.f32 %v2978, 0.0
        %v2987 = vmax.f32 %v2979, 0.0
        %v2988 = vmax.f32 %v2980, 0.0
        %v2989 = vmax.f32 %v2981, 0.0
        %v2990 = vmax.f32 %v2982, 0.0
        %v2991 = vmax.f32 %v2983, 0.0
        %v2992 = vmax.f32 %v2984, 0.0
        %v2993 = vmax.f32 %v2985, %v2986
        %v2994 = vmax.f32 %v2987, %v2988
        %v2995 = vmax.f32 %v2989, %v2990
        %v2996 = vmax.f32 %v2991, %v2992
        %2997 = vst.msk [vmem:[#allocation5] sm:$0xff] %vm1810, %v2993
        %2998 = vst.msk [vmem:[#allocation5 + $0x8] sm:$0xff] %vm1810, %v2994
        %2999 = vst.msk [vmem:[#allocation5 + $0x10] sm:$0xff] %vm1810, %v2995
        %3000 = vst.msk [vmem:[#allocation5 + $0x18] sm:$0xff] %vm1810, %v2996
        %v3001 = vld [vmem:[#allocation5] ss:$2 sm:$0xf]
        %s3002 = scalar_lea.vmem [#allocation5], 8
        %v3003 = vld [vmem:[%s3002] ss:$2 sm:$0xf]
        %s3004 = scalar_lea.vmem [#allocation5], 16
        %v3005 = vld [vmem:[%s3004] ss:$2 sm:$0xf]
        %s3006 = scalar_lea.vmem [#allocation5], 24
        %v3007 = vld [vmem:[%s3006] ss:$2 sm:$0xf]
        %s3008 = scalar_lea.vmem [#allocation5], 1
        %v3009 = vld [vmem:[%s3008] ss:$2 sm:$0xf]
        %s3010 = scalar_lea.vmem [#allocation5], 9
        %v3011 = vld [vmem:[%s3010] ss:$2 sm:$0xf]
        %s3012 = scalar_lea.vmem [#allocation5], 17
        %v3013 = vld [vmem:[%s3012] ss:$2 sm:$0xf]
        %s3014 = scalar_lea.vmem [#allocation5], 25
        %v3015 = vld [vmem:[%s3014] ss:$2 sm:$0xf]
        %v3016 = vmax.f32 %v3001, %v3009
        %v3017 = vmax.f32 %v3003, %v3011
        %v3018 = vmax.f32 %v3005, %v3013
        %v3019 = vmax.f32 %v3007, %v3015
        %vm3020 = vcmask 125952
        %3021 = vst.msk [vmem:[%s271] sm:$0xf] %vm3020, %v3016
        %3022 = vst.msk [vmem:[%s271 + $0x4] sm:$0xf] %vm3020, %v3017
        %3023 = vst.msk [vmem:[%s271 + $0x8] sm:$0xf] %vm3020, %v3018
        %3024 = vst.msk [vmem:[%s271 + $0xc] sm:$0xf] %vm3020, %v3019
        %s3025 = sand.u32 %s181, 1
        %s3026 = scalar_lea.sflag [#allocation7], %s3025
        %s3027 = sand.u32 %s181, 1
        %s3028 = smul.addr %s3027, 16
        %s3029 = scalar_lea.vmem [#allocation6], %s3028
        // Predicated region
        $region49: #{cnn2d_block.1} parent=47 // pred_check
          %p3030 = pneg %p191
        $region50: #{cnn2d_block.1} parent=47 // pred_check_branch
          %3032 = sbr.rel (%p3030) target = $region52
        $region51: #{cnn2d_block.1} parent=47 // pred_region
          %s3034 = ssub.s32 256, 256
          %3035 = vsyncadd %s3026, %s3034
          %s3036 = smul.addr %s21, 4
          %s3037 = smul.addr %s3036, 64
          %s3038 = scalar_lea.hbm %s7, %s3037
          %s3039 = sshll.u32 %s3029, 4
          %s3040 = int_to_ptr.vmem [resolvable:$true] %s3039
          %3045 = dma.vmem_to_hbm [thread:$0]  %s3040, 256, %s3038, %s3026, 64, 64, 4
        $region52: #{cnn2d_block.1} parent=47 // pred_fallthru
          _
      $region48: #{cnn2d_block.1} parent=5 // pred_fallthru
        _
      %p3046 = scmp.le.s32.totalorder 2, %s16
      // Predicated region
      $region53: #{cnn2d_block.1} parent=5 // pred_check
        %p3047 = pneg %p3046
      $region54: #{cnn2d_block.1} parent=5 // pred_check_branch
        %3049 = sbr.rel (%p3047) target = $region56
      $region55: #{cnn2d_block.1} parent=5 // pred_region
        %s3050 = ssub.s32 %s16, 2
        // Predicated region
        $region57: #{cnn2d_block.1} parent=55 // pred_check
          %p3051 = pneg %p197
        $region58: #{cnn2d_block.1} parent=55 // pred_check_branch
          %3053 = sbr.rel (%p3051) target = $region60
        $region59: #{cnn2d_block.1} parent=55 // pred_region
          %s3054 = sand.u32 %s182, 1
          %s3055 = scalar_lea.sflag [#allocation7], %s3054
          %s3056 = sand.u32 %s182, 1
          %s3057 = smul.addr %s3056, 16
          %s3058 = scalar_lea.vmem [#allocation6], %s3057
          %3059 = dma.done %s3055, 256
        $region60: #{cnn2d_block.1} parent=55 // pred_fallthru
          _
      $region56: #{cnn2d_block.1} parent=5 // pred_fallthru
        _
    $region6: #{cnn2d_block.1} parent=1 // loop_footer
      %s20 = sadd.s32 1, %s16
    $region7: #{cnn2d_block.1} parent=1 // loop_footer_branch
      %15 = sbr.rel target = $region3
    $region8: #{cnn2d_block.1} parent=1 // loop_exit
      _
    %3060 = vsyncpa [#allocation7], 1
    %s3061 = scalar_lea.sflag [#allocation7], 1
    %3062 = vsyncpa %s3061, 1

</llo_original>
